<compile_context>
chip_gen: v5e
topology: v5e:2x2
jax: 0.10.0
libtpu: 0.0.40
codegen_flags: <defaults>
</compile_context>

<pallas_src>
import functools

import jax
import jax.numpy as jnp
from jax.experimental import pallas as pl
from jax.experimental.pallas import tpu as pltpu


_NUM_CLASSES = 10
_LANE = 128          # lane-dense padding for hidden / logit dimensions
_NEG_BIG = -1e30     # bias for padded logit lanes -> exp() underflows to 0


def _round_up(n, m):
    return ((n + m - 1) // m) * m


def _mnist_mlp_kernel(x_ref, w1_ref, b1_ref, w2_ref, b2_ref, w3_ref, b3_ref,
                      o_ref, *, sigmoid):
    """Fused fc1 -> act -> fc2 -> act -> fc3 -> softmax for one batch block.

    x_ref is (TB, K_pad) bf16; weights are bf16 (in, out); biases are f32 row
    vectors.  Matmuls accumulate in f32 on the MXU; activations / softmax stay
    f32.  The only HBM store is the lane-dense (TB, 128) softmax slab.
    """
    if sigmoid:
        # One EUP transcendental (tanh) per element instead of exp + divide.
        act = lambda v: 0.5 * jnp.tanh(0.5 * v) + 0.5
    else:
        act = lambda v: jnp.maximum(v, 0.0)

    x = x_ref[...]                                                   # (TB, K_pad) bf16
    h1 = jnp.dot(x, w1_ref[...], preferred_element_type=jnp.float32) + b1_ref[...]
    z1 = act(h1)                                                     # (TB, H1) f32
    h2 = jnp.dot(z1.astype(jnp.bfloat16), w2_ref[...],
                 preferred_element_type=jnp.float32) + b2_ref[...]
    z2 = act(h2)                                                     # (TB, H2) f32
    # Padded logit lanes carry zero weight columns and a -1e30 bias, so they
    # contribute 0 to the softmax; padded z2 columns (0 or 0.5 under sigmoid)
    # hit zero w3 rows, so logits are unaffected.
    h3 = jnp.dot(z2.astype(jnp.bfloat16), w3_ref[...],
                 preferred_element_type=jnp.float32) + b3_ref[...]   # (TB, 128)
    m = jnp.max(h3, axis=-1, keepdims=True)
    e = jnp.exp(h3 - m)
    inv = pl.reciprocal(jnp.sum(e, axis=-1, keepdims=True), approx=False)
    o_ref[...] = (e * inv).astype(o_ref.dtype)                       # (TB, 128)


def prepare_mnist_params(w1, b1, w2, b2, w3, b3):
    """One-time parameter prep (hoisted out of the per-call hot path).

    Transposes weights to (in, out), casts them to bf16, and zero-pads every
    dimension to a multiple of 128 lanes (K: 784->896, hidden2: 64->128,
    classes: 10->128).  The classifier bias is padded with -1e30 so padded
    logits vanish under softmax.  Biases stay f32.
    """
    f32, bf16 = jnp.float32, jnp.bfloat16
    m0, k = w1.shape
    m1 = w2.shape[0]
    n_cls = w3.shape[0]
    assert n_cls <= _LANE
    k_pad = _round_up(k, _LANE)
    h1_pad = _round_up(m0, _LANE)
    h2_pad = _round_up(m1, _LANE)

    w1t = jnp.zeros((k_pad, h1_pad), bf16).at[:k, :m0].set(
        jnp.asarray(w1, f32).T.astype(bf16))
    w2t = jnp.zeros((h1_pad, h2_pad), bf16).at[:m0, :m1].set(
        jnp.asarray(w2, f32).T.astype(bf16))
    w3t = jnp.zeros((h2_pad, _LANE), bf16).at[:m1, :n_cls].set(
        jnp.asarray(w3, f32).T.astype(bf16))
    b1r = jnp.zeros((1, h1_pad), f32).at[0, :m0].set(jnp.asarray(b1, f32))
    b2r = jnp.zeros((1, h2_pad), f32).at[0, :m1].set(jnp.asarray(b2, f32))
    b3r = jnp.full((1, _LANE), _NEG_BIG, f32).at[0, :n_cls].set(
        jnp.asarray(b3, f32))
    return (w1t, b1r, w2t, b2r, w3t, b3r), n_cls


def _pick_batch_block(b):
    # <= 512 rows per block keeps residency small even on v7x's 64 MiB VMEM.
    for tb in (512, 256, 128):
        if b % tb == 0:
            return tb
    return b


@functools.partial(jax.jit, static_argnames=("sigmoid", "n_cls"))
def mnist_forward_pallas(x, params, sigmoid=False, n_cls=_NUM_CLASSES):
    """x: (B, 784) f32 -> softmax class probabilities (B, n_cls) f32."""
    w1t, b1r, w2t, b2r, w3t, b3r = params
    b, k = x.shape
    k_pad, h1 = w1t.shape
    h2 = w2t.shape[1]
    tb = _pick_batch_block(b)

    # Pad K to a lane multiple and cast to bf16 once (halves x's HBM bytes).
    x_p = jnp.pad(x.astype(jnp.bfloat16), ((0, 0), (0, k_pad - k)))

    flops = 2 * b * (k_pad * h1 + h1 * h2 + h2 * _LANE)
    transcendentals = b * (_LANE + ((h1 + h2) if sigmoid else 0))
    bytes_accessed = (x_p.size * 2
                      + (w1t.size + w2t.size + w3t.size) * 2
                      + (b1r.size + b2r.size + b3r.size) * 4
                      + b * _LANE * 4)

    out_pad = pl.pallas_call(
        functools.partial(_mnist_mlp_kernel, sigmoid=sigmoid),
        out_shape=jax.ShapeDtypeStruct((b, _LANE), jnp.float32),
        grid=(b // tb,),
        in_specs=[
            pl.BlockSpec((tb, k_pad), lambda i: (i, 0)),     # x: blocked on batch
            pl.BlockSpec((k_pad, h1), lambda i: (0, 0)),     # w1
            pl.BlockSpec((1, h1), lambda i: (0, 0)),         # b1
            pl.BlockSpec((h1, h2), lambda i: (0, 0)),        # w2
            pl.BlockSpec((1, h2), lambda i: (0, 0)),         # b2
            pl.BlockSpec((h2, _LANE), lambda i: (0, 0)),     # w3
            pl.BlockSpec((1, _LANE), lambda i: (0, 0)),      # b3
        ],
        out_specs=pl.BlockSpec((tb, _LANE), lambda i: (i, 0)),
        compiler_params=pltpu.CompilerParams(
            dimension_semantics=("parallel",)),
        cost_estimate=pl.CostEstimate(
            flops=flops, transcendentals=transcendentals,
            bytes_accessed=bytes_accessed),
    )(x_p, w1t, b1r, w2t, b2r, w3t, b3r)
    # Lane-dense slab -> real class dimension (cheap XLA slice outside kernel).
    return out_pad[:, :n_cls]


def mnist_ref(x, w1, b1, w2, b2, w3, b3, sigmoid=False):
    """Pure-JAX f32 reference mirroring the PyTorch MnistNet forward."""
    hp = jax.lax.Precision.HIGHEST
    act = (lambda v: 1.0 / (1.0 + jnp.exp(-v))) if sigmoid \
        else (lambda v: jnp.maximum(v, 0.0))
    h1 = jnp.dot(x, w1.T, precision=hp) + b1
    z1 = act(h1)
    h2 = jnp.dot(z1, w2.T, precision=hp) + b2
    z2 = act(h2)
    h3 = jnp.dot(z2, w3.T, precision=hp) + b3
    return jax.nn.softmax(h3, axis=1)


def mnist_ref_bf16(x, w1, b1, w2, b2, w3, b3, sigmoid=False):
    """Reference with the same bf16-operand / f32-accumulate quantization."""
    bf = jnp.bfloat16
    act = (lambda v: 0.5 * jnp.tanh(0.5 * v) + 0.5) if sigmoid \
        else (lambda v: jnp.maximum(v, 0.0))
    h1 = jnp.dot(x.astype(bf), w1.T.astype(bf),
                 preferred_element_type=jnp.float32) + b1
    z1 = act(h1)
    h2 = jnp.dot(z1.astype(bf), w2.T.astype(bf),
                 preferred_element_type=jnp.float32) + b2
    z2 = act(h2)
    h3 = jnp.dot(z2.astype(bf), w3.T.astype(bf),
                 preferred_element_type=jnp.float32) + b3
    return jax.nn.softmax(h3, axis=1)


if __name__ == "__main__":
    # MnistNet(middle_layer=(128, 64)); batch 128 fills the MXU M dimension.
    B = 128
    in_features = 28 * 28
    middle_layer = (128, 64)

    key = jax.random.PRNGKey(0)
    kx, k1, kb1, k2, kb2, k3, kb3 = jax.random.split(key, 7)

    x = jax.random.normal(kx, (B, in_features), dtype=jnp.float32)
    w1 = jax.random.normal(k1, (middle_layer[0], in_features), jnp.float32) * 0.03
    b1 = jax.random.normal(kb1, (middle_layer[0],), jnp.float32) * 0.1
    w2 = jax.random.normal(k2, (middle_layer[1], middle_layer[0]), jnp.float32) * 0.1
    b2 = jax.random.normal(kb2, (middle_layer[1],), jnp.float32) * 0.1
    w3 = jax.random.normal(k3, (_NUM_CLASSES, middle_layer[1]), jnp.float32) * 0.1
    b3 = jax.random.normal(kb3, (_NUM_CLASSES,), jnp.float32) * 0.1

    # One-time parameter prep (transpose + bf16 cast + lane padding).
    params, n_cls = prepare_mnist_params(w1, b1, w2, b2, w3, b3)
    params = jax.block_until_ready(params)

    for use_sigmoid in (False, True):
        out = mnist_forward_pallas(x, params, sigmoid=use_sigmoid, n_cls=n_cls)
        out = jax.block_until_ready(out)

        ref32 = mnist_ref(x, w1, b1, w2, b2, w3, b3, sigmoid=use_sigmoid)
        ref16 = mnist_ref_bf16(x, w1, b1, w2, b2, w3, b3, sigmoid=use_sigmoid)
        assert out.shape == ref32.shape, (out.shape, ref32.shape)

        # Tight check vs a reference with identical bf16-operand quantization.
        err16 = float(jnp.max(jnp.abs(out - ref16)))
        assert jnp.allclose(out, ref16, atol=5e-4, rtol=1e-3), (use_sigmoid, err16)
        # Looser check vs the exact f32 PyTorch-equivalent forward.
        err32 = float(jnp.max(jnp.abs(out - ref32)))
        assert jnp.allclose(out, ref32, atol=2e-2, rtol=0.0), (use_sigmoid, err32)
        # Softmax rows must sum to 1.
        assert jnp.allclose(jnp.sum(out, axis=1), 1.0, atol=1e-5), use_sigmoid

    print("KERNEL_OK")
</pallas_src>

<mosaic_0001>
module attributes {stable_mosaic.version = 11 : i64} {
  func.func @_mnist_mlp_kernel(%arg0: i32, %arg1: memref<128x896xbf16, #tpu.memory_space<vmem>>, %arg2: memref<896x128xbf16, #tpu.memory_space<vmem>>, %arg3: memref<1x128xf32, #tpu.memory_space<vmem>>, %arg4: memref<128x128xbf16, #tpu.memory_space<vmem>>, %arg5: memref<1x128xf32, #tpu.memory_space<vmem>>, %arg6: memref<128x128xbf16, #tpu.memory_space<vmem>>, %arg7: memref<1x128xf32, #tpu.memory_space<vmem>>, %arg8: memref<128x128xf32, #tpu.memory_space<vmem>>) attributes {dimension_semantics = [#tpu.dimension_semantics<parallel>], iteration_bounds = array<i64: 1>, scalar_prefetch = 0 : i64, scratch_operands = 0 : i64, tpu.core_type = #tpu.core_type<tc>, window_params = [{transform_indices = @transform_0, window_bounds = array<i64: 128, 896>}, {pipeline_mode = #tpu.pipeline_mode<synchronous>, transform_indices = @transform_1, window_bounds = array<i64: 896, 128>}, {pipeline_mode = #tpu.pipeline_mode<synchronous>, transform_indices = @transform_2, window_bounds = array<i64: 1, 128>}, {pipeline_mode = #tpu.pipeline_mode<synchronous>, transform_indices = @transform_3, window_bounds = array<i64: 128, 128>}, {pipeline_mode = #tpu.pipeline_mode<synchronous>, transform_indices = @transform_4, window_bounds = array<i64: 1, 128>}, {pipeline_mode = #tpu.pipeline_mode<synchronous>, transform_indices = @transform_5, window_bounds = array<i64: 128, 128>}, {pipeline_mode = #tpu.pipeline_mode<synchronous>, transform_indices = @transform_6, window_bounds = array<i64: 1, 128>}, {transform_indices = @transform_7, window_bounds = array<i64: 128, 128>}]} {
    %c0 = arith.constant 0 : index
    %c0_0 = arith.constant 0 : index
    %0 = vector.load %arg1[%c0, %c0_0] : memref<128x896xbf16, #tpu.memory_space<vmem>>, vector<128x896xbf16>
    %c0_1 = arith.constant 0 : index
    %c0_2 = arith.constant 0 : index
    %1 = vector.load %arg2[%c0_1, %c0_2] : memref<896x128xbf16, #tpu.memory_space<vmem>>, vector<896x128xbf16>
    %cst = arith.constant dense<0.000000e+00> : vector<128x128xf32>
    %2 = tpu.matmul %0, %1, %cst {dimension_numbers = #tpu.dot_dimension_numbers<[1], [0], [0], [1], [0, 0, 1, 1], [], []>} : vector<128x896xbf16>, vector<896x128xbf16>, vector<128x128xf32> -> vector<128x128xf32>
    %c0_3 = arith.constant 0 : index
    %c0_4 = arith.constant 0 : index
    %3 = vector.load %arg3[%c0_3, %c0_4] : memref<1x128xf32, #tpu.memory_space<vmem>>, vector<1x128xf32>
    %4 = vector.broadcast %3 : vector<1x128xf32> to vector<128x128xf32>
    %5 = arith.addf %2, %4 : vector<128x128xf32>
    %cst_5 = arith.constant 0.000000e+00 : f32
    %6 = vector.broadcast %cst_5 : f32 to vector<128x128xf32>
    %7 = arith.maximumf %5, %6 : vector<128x128xf32>
    %8 = arith.truncf %7 : vector<128x128xf32> to vector<128x128xbf16>
    %c0_6 = arith.constant 0 : index
    %c0_7 = arith.constant 0 : index
    %9 = vector.load %arg4[%c0_6, %c0_7] : memref<128x128xbf16, #tpu.memory_space<vmem>>, vector<128x128xbf16>
    %cst_8 = arith.constant dense<0.000000e+00> : vector<128x128xf32>
    %10 = tpu.matmul %8, %9, %cst_8 {dimension_numbers = #tpu.dot_dimension_numbers<[1], [0], [0], [1], [0, 0, 1, 1], [], []>} : vector<128x128xbf16>, vector<128x128xbf16>, vector<128x128xf32> -> vector<128x128xf32>
    %c0_9 = arith.constant 0 : index
    %c0_10 = arith.constant 0 : index
    %11 = vector.load %arg5[%c0_9, %c0_10] : memref<1x128xf32, #tpu.memory_space<vmem>>, vector<1x128xf32>
    %12 = vector.broadcast %11 : vector<1x128xf32> to vector<128x128xf32>
    %13 = arith.addf %10, %12 : vector<128x128xf32>
    %cst_11 = arith.constant 0.000000e+00 : f32
    %14 = vector.broadcast %cst_11 : f32 to vector<128x128xf32>
    %15 = arith.maximumf %13, %14 : vector<128x128xf32>
    %16 = arith.truncf %15 : vector<128x128xf32> to vector<128x128xbf16>
    %c0_12 = arith.constant 0 : index
    %c0_13 = arith.constant 0 : index
    %17 = vector.load %arg6[%c0_12, %c0_13] : memref<128x128xbf16, #tpu.memory_space<vmem>>, vector<128x128xbf16>
    %cst_14 = arith.constant dense<0.000000e+00> : vector<128x128xf32>
    %18 = tpu.matmul %16, %17, %cst_14 {dimension_numbers = #tpu.dot_dimension_numbers<[1], [0], [0], [1], [0, 0, 1, 1], [], []>} : vector<128x128xbf16>, vector<128x128xbf16>, vector<128x128xf32> -> vector<128x128xf32>
    %c0_15 = arith.constant 0 : index
    %c0_16 = arith.constant 0 : index
    %19 = vector.load %arg7[%c0_15, %c0_16] : memref<1x128xf32, #tpu.memory_space<vmem>>, vector<1x128xf32>
    %20 = vector.broadcast %19 : vector<1x128xf32> to vector<128x128xf32>
    %21 = arith.addf %18, %20 : vector<128x128xf32>
    %cst_17 = arith.constant dense<0xFF800000> : vector<128xf32>
    %22 = vector.multi_reduction <maximumf>, %21, %cst_17 [1] : vector<128x128xf32> to vector<128xf32>
    %23 = vector.shape_cast %22 : vector<128xf32> to vector<128x1xf32>
    %24 = vector.broadcast %23 : vector<128x1xf32> to vector<128x128xf32>
    %25 = arith.subf %21, %24 : vector<128x128xf32>
    %26 = math.exp %25 : vector<128x128xf32>
    %cst_18 = arith.constant dense<0.000000e+00> : vector<128xf32>
    %27 = vector.multi_reduction <add>, %26, %cst_18 [1] : vector<128x128xf32> to vector<128xf32>
    %28 = vector.shape_cast %27 : vector<128xf32> to vector<128x1xf32>
    %29 = tpu.reciprocal %28 : vector<128x1xf32> -> vector<128x1xf32>
    %30 = vector.broadcast %29 : vector<128x1xf32> to vector<128x128xf32>
    %31 = arith.mulf %26, %30 : vector<128x128xf32>
    %c0_19 = arith.constant 0 : index
    %c0_20 = arith.constant 0 : index
    %32 = vector.load %arg8[%c0_19, %c0_20] : memref<128x128xf32, #tpu.memory_space<vmem>>, vector<128x128xf32>
    tpu.vector_store %arg8[%c0_19, %c0_20], %31 {strides = array<i32>} : memref<128x128xf32, #tpu.memory_space<vmem>>, vector<128x128xf32>,
    return
  }
  func.func @transform_0(%arg0: i32) -> (i32, i32) {
    %c0_i32 = arith.constant 0 : i32
    %c0_i32_0 = arith.constant 0 : i32
    return %arg0, %c0_i32 : i32, i32
  }
  func.func @transform_1(%arg0: i32) -> (i32, i32) {
    %c0_i32 = arith.constant 0 : i32
    %c0_i32_0 = arith.constant 0 : i32
    %c0_i32_1 = arith.constant 0 : i32
    return %c0_i32, %c0_i32_0 : i32, i32
  }
  func.func @transform_2(%arg0: i32) -> (i32, i32) {
    %c0_i32 = arith.constant 0 : i32
    %c0_i32_0 = arith.constant 0 : i32
    %c0_i32_1 = arith.constant 0 : i32
    return %c0_i32, %c0_i32_0 : i32, i32
  }
  func.func @transform_3(%arg0: i32) -> (i32, i32) {
    %c0_i32 = arith.constant 0 : i32
    %c0_i32_0 = arith.constant 0 : i32
    %c0_i32_1 = arith.constant 0 : i32
    return %c0_i32, %c0_i32_0 : i32, i32
  }
  func.func @transform_4(%arg0: i32) -> (i32, i32) {
    %c0_i32 = arith.constant 0 : i32
    %c0_i32_0 = arith.constant 0 : i32
    %c0_i32_1 = arith.constant 0 : i32
    return %c0_i32, %c0_i32_0 : i32, i32
  }
  func.func @transform_5(%arg0: i32) -> (i32, i32) {
    %c0_i32 = arith.constant 0 : i32
    %c0_i32_0 = arith.constant 0 : i32
    %c0_i32_1 = arith.constant 0 : i32
    return %c0_i32, %c0_i32_0 : i32, i32
  }
  func.func @transform_6(%arg0: i32) -> (i32, i32) {
    %c0_i32 = arith.constant 0 : i32
    %c0_i32_0 = arith.constant 0 : i32
    %c0_i32_1 = arith.constant 0 : i32
    return %c0_i32, %c0_i32_0 : i32, i32
  }
  func.func @transform_7(%arg0: i32) -> (i32, i32) {
    %c0_i32 = arith.constant 0 : i32
    %c0_i32_0 = arith.constant 0 : i32
    return %arg0, %c0_i32 : i32, i32
  }
}

</mosaic_0001>

<llo_original>
// kernel: mnist_forward_pallas.1
$region0: #{mnist_forward_pallas.1}
  #allocation0 [shape = 'u32[]', space=smem, size = 0x4, offset = 0x4, fixed_abs, tag = 'smem constant byte address 0x4 - core index']
  #allocation1 [shape = 'u32[72,128]{1,0:T(1,128)}', space=vmem, size = 0x9000, scoped, tag = 'internal scratch']
  %s0 = inlined_call_operand.vmem [shape: bf16[128,896], index: 0, kind: input, shape index: {}]
  %s1 = inlined_call_operand.vmem [shape: bf16[896,128], index: 1, kind: input, shape index: {}]
  %s2 = inlined_call_operand.vmem [shape: f32[1,128], index: 2, kind: input, shape index: {}]
  %s3 = inlined_call_operand.vmem [shape: bf16[128,128], index: 3, kind: input, shape index: {}]
  %s4 = inlined_call_operand.vmem [shape: f32[1,128], index: 4, kind: input, shape index: {}]
  %s5 = inlined_call_operand.vmem [shape: bf16[128,128], index: 5, kind: input, shape index: {}]
  %s6 = inlined_call_operand.vmem [shape: f32[1,128], index: 6, kind: input, shape index: {}]
  %s7 = inlined_call_operand.vmem [shape: f32[128,128], index: 7, kind: output, shape index: {}]
  %s8 = sld [smem:[#allocation0]]
  $region38: #{mnist_forward_pallas.1} parent=0
    _
  %s10 = ssub.s32 1, %s8
  %s11 = scalar_select 0, %s10, %s8
  // Predicated region
  $region2: #{mnist_forward_pallas.1} parent=0 // pred_check
    _
  $region3: #{mnist_forward_pallas.1} parent=0 // pred_check_branch
    %13 = sbr.rel (0) target = $region5
  $region4: #{mnist_forward_pallas.1} parent=0 // pred_region
    _
  $region5: #{mnist_forward_pallas.1} parent=0 // pred_fallthru
    _
  // Predicated region
  $region6: #{mnist_forward_pallas.1} parent=0 // pred_check
    _
  $region7: #{mnist_forward_pallas.1} parent=0 // pred_check_branch
    %15 = sbr.rel (0) target = $region9
  $region8: #{mnist_forward_pallas.1} parent=0 // pred_region
    _
  $region9: #{mnist_forward_pallas.1} parent=0 // pred_fallthru
    _
  // Predicated region
  $region10: #{mnist_forward_pallas.1} parent=0 // pred_check
    _
  $region11: #{mnist_forward_pallas.1} parent=0 // pred_check_branch
    %17 = sbr.rel (0) target = $region13
  $region12: #{mnist_forward_pallas.1} parent=0 // pred_region
    _
  $region13: #{mnist_forward_pallas.1} parent=0 // pred_fallthru
    _
  // Predicated region
  $region14: #{mnist_forward_pallas.1} parent=0 // pred_check
    _
  $region15: #{mnist_forward_pallas.1} parent=0 // pred_check_branch
    %19 = sbr.rel (0) target = $region17
  $region16: #{mnist_forward_pallas.1} parent=0 // pred_region
    _
  $region17: #{mnist_forward_pallas.1} parent=0 // pred_fallthru
    _
  // Predicated region
  $region18: #{mnist_forward_pallas.1} parent=0 // pred_check
    _
  $region19: #{mnist_forward_pallas.1} parent=0 // pred_check_branch
    %21 = sbr.rel (0) target = $region21
  $region20: #{mnist_forward_pallas.1} parent=0 // pred_region
    _
  $region21: #{mnist_forward_pallas.1} parent=0 // pred_fallthru
    _
  // Predicated region
  $region22: #{mnist_forward_pallas.1} parent=0 // pred_check
    _
  $region23: #{mnist_forward_pallas.1} parent=0 // pred_check_branch
    %23 = sbr.rel (0) target = $region25
  $region24: #{mnist_forward_pallas.1} parent=0 // pred_region
    _
  $region25: #{mnist_forward_pallas.1} parent=0 // pred_fallthru
    _
  // Predicated region
  $region26: #{mnist_forward_pallas.1} parent=0 // pred_check
    _
  $region27: #{mnist_forward_pallas.1} parent=0 // pred_check_branch
    %25 = sbr.rel (0) target = $region29
  $region28: #{mnist_forward_pallas.1} parent=0 // pred_region
    _
  $region29: #{mnist_forward_pallas.1} parent=0 // pred_fallthru
    _
  %v26 = vld [vmem:[%s0] sm:$0xff]
  %v27 = vld [vmem:[%s0 + $0x8] sm:$0xff]
  %v28 = vld [vmem:[%s0 + $0x10] sm:$0xff]
  %v29 = vld [vmem:[%s0 + $0x18] sm:$0xf]
  %v30 = vld [vmem:[%s0 + $0x1c] sm:$0xff]
  %v31 = vld [vmem:[%s0 + $0x24] sm:$0xff]
  %v32 = vld [vmem:[%s0 + $0x2c] sm:$0xff]
  %v33 = vld [vmem:[%s0 + $0x34] sm:$0xf]
  %v34 = vld [vmem:[%s0 + $0x38] sm:$0xff]
  %v35 = vld [vmem:[%s0 + $0x40] sm:$0xff]
  %v36 = vld [vmem:[%s0 + $0x48] sm:$0xff]
  %v37 = vld [vmem:[%s0 + $0x50] sm:$0xf]
  %v38 = vld [vmem:[%s0 + $0x54] sm:$0xff]
  %v39 = vld [vmem:[%s0 + $0x5c] sm:$0xff]
  %v40 = vld [vmem:[%s0 + $0x64] sm:$0xff]
  %v41 = vld [vmem:[%s0 + $0x6c] sm:$0xf]
  %v42 = vld [vmem:[%s0 + $0x70] sm:$0xff]
  %v43 = vld [vmem:[%s0 + $0x78] sm:$0xff]
  %v44 = vld [vmem:[%s0 + $0x80] sm:$0xff]
  %v45 = vld [vmem:[%s0 + $0x88] sm:$0xf]
  %v46 = vld [vmem:[%s0 + $0x8c] sm:$0xff]
  %v47 = vld [vmem:[%s0 + $0x94] sm:$0xff]
  %v48 = vld [vmem:[%s0 + $0x9c] sm:$0xff]
  %v49 = vld [vmem:[%s0 + $0xa4] sm:$0xf]
  %v50 = vld [vmem:[%s0 + $0xa8] sm:$0xff]
  %v51 = vld [vmem:[%s0 + $0xb0] sm:$0xff]
  %v52 = vld [vmem:[%s0 + $0xb8] sm:$0xff]
  %v53 = vld [vmem:[%s0 + $0xc0] sm:$0xf]
  %v54 = vld [vmem:[%s0 + $0xc4] sm:$0xff]
  %v55 = vld [vmem:[%s0 + $0xcc] sm:$0xff]
  %v56 = vld [vmem:[%s0 + $0xd4] sm:$0xff]
  %v57 = vld [vmem:[%s0 + $0xdc] sm:$0xf]
  %v58 = vld [vmem:[%s0 + $0xe0] sm:$0xff]
  %v59 = vld [vmem:[%s0 + $0xe8] sm:$0xff]
  %v60 = vld [vmem:[%s0 + $0xf0] sm:$0xff]
  %v61 = vld [vmem:[%s0 + $0xf8] sm:$0xf]
  %v62 = vld [vmem:[%s0 + $0xfc] sm:$0xff]
  %v63 = vld [vmem:[%s0 + $0x104] sm:$0xff]
  %v64 = vld [vmem:[%s0 + $0x10c] sm:$0xff]
  %v65 = vld [vmem:[%s0 + $0x114] sm:$0xf]
  %v66 = vld [vmem:[%s0 + $0x118] sm:$0xff]
  %v67 = vld [vmem:[%s0 + $0x120] sm:$0xff]
  %v68 = vld [vmem:[%s0 + $0x128] sm:$0xff]
  %v69 = vld [vmem:[%s0 + $0x130] sm:$0xf]
  %v70 = vld [vmem:[%s0 + $0x134] sm:$0xff]
  %v71 = vld [vmem:[%s0 + $0x13c] sm:$0xff]
  %v72 = vld [vmem:[%s0 + $0x144] sm:$0xff]
  %v73 = vld [vmem:[%s0 + $0x14c] sm:$0xf]
  %v74 = vld [vmem:[%s0 + $0x150] sm:$0xff]
  %v75 = vld [vmem:[%s0 + $0x158] sm:$0xff]
  %v76 = vld [vmem:[%s0 + $0x160] sm:$0xff]
  %v77 = vld [vmem:[%s0 + $0x168] sm:$0xf]
  %v78 = vld [vmem:[%s0 + $0x16c] sm:$0xff]
  %v79 = vld [vmem:[%s0 + $0x174] sm:$0xff]
  %v80 = vld [vmem:[%s0 + $0x17c] sm:$0xff]
  %v81 = vld [vmem:[%s0 + $0x184] sm:$0xf]
  %v82 = vld [vmem:[%s0 + $0x188] sm:$0xff]
  %v83 = vld [vmem:[%s0 + $0x190] sm:$0xff]
  %v84 = vld [vmem:[%s0 + $0x198] sm:$0xff]
  %v85 = vld [vmem:[%s0 + $0x1a0] sm:$0xf]
  %v86 = vld [vmem:[%s0 + $0x1a4] sm:$0xff]
  %v87 = vld [vmem:[%s0 + $0x1ac] sm:$0xff]
  %v88 = vld [vmem:[%s0 + $0x1b4] sm:$0xff]
  %v89 = vld [vmem:[%s0 + $0x1bc] sm:$0xf]
  %v90 = vld [vmem:[%s1] sm:$0xf]
  %v91 = vld [vmem:[%s1 + $0x4] sm:$0xf]
  %v92 = vld [vmem:[%s1 + $0x8] sm:$0xf]
  %v93 = vld [vmem:[%s1 + $0xc] sm:$0xf]
  %v94 = vld [vmem:[%s1 + $0x10] sm:$0xf]
  %v95 = vld [vmem:[%s1 + $0x14] sm:$0xf]
  %v96 = vld [vmem:[%s1 + $0x18] sm:$0xf]
  %v97 = vld [vmem:[%s1 + $0x1c] sm:$0xf]
  %v98 = vld [vmem:[%s1 + $0x20] sm:$0xf]
  %v99 = vld [vmem:[%s1 + $0x24] sm:$0xf]
  %v100 = vld [vmem:[%s1 + $0x28] sm:$0xf]
  %v101 = vld [vmem:[%s1 + $0x2c] sm:$0xf]
  %v102 = vld [vmem:[%s1 + $0x30] sm:$0xf]
  %v103 = vld [vmem:[%s1 + $0x34] sm:$0xf]
  %v104 = vld [vmem:[%s1 + $0x38] sm:$0xf]
  %v105 = vld [vmem:[%s1 + $0x3c] sm:$0xf]
  %v106 = vld [vmem:[%s1 + $0x40] sm:$0xf]
  %v107 = vld [vmem:[%s1 + $0x44] sm:$0xf]
  %v108 = vld [vmem:[%s1 + $0x48] sm:$0xf]
  %v109 = vld [vmem:[%s1 + $0x4c] sm:$0xf]
  %v110 = vld [vmem:[%s1 + $0x50] sm:$0xf]
  %v111 = vld [vmem:[%s1 + $0x54] sm:$0xf]
  %v112 = vld [vmem:[%s1 + $0x58] sm:$0xf]
  %v113 = vld [vmem:[%s1 + $0x5c] sm:$0xf]
  %v114 = vld [vmem:[%s1 + $0x60] sm:$0xf]
  %v115 = vld [vmem:[%s1 + $0x64] sm:$0xf]
  %v116 = vld [vmem:[%s1 + $0x68] sm:$0xf]
  %v117 = vld [vmem:[%s1 + $0x6c] sm:$0xf]
  %v118 = vld [vmem:[%s1 + $0x70] sm:$0xf]
  %v119 = vld [vmem:[%s1 + $0x74] sm:$0xf]
  %v120 = vld [vmem:[%s1 + $0x78] sm:$0xf]
  %v121 = vld [vmem:[%s1 + $0x7c] sm:$0xf]
  %v122 = vld [vmem:[%s1 + $0x80] sm:$0xf]
  %v123 = vld [vmem:[%s1 + $0x84] sm:$0xf]
  %v124 = vld [vmem:[%s1 + $0x88] sm:$0xf]
  %v125 = vld [vmem:[%s1 + $0x8c] sm:$0xf]
  %v126 = vld [vmem:[%s1 + $0x90] sm:$0xf]
  %v127 = vld [vmem:[%s1 + $0x94] sm:$0xf]
  %v128 = vld [vmem:[%s1 + $0x98] sm:$0xf]
  %v129 = vld [vmem:[%s1 + $0x9c] sm:$0xf]
  %v130 = vld [vmem:[%s1 + $0xa0] sm:$0xf]
  %v131 = vld [vmem:[%s1 + $0xa4] sm:$0xf]
  %v132 = vld [vmem:[%s1 + $0xa8] sm:$0xf]
  %v133 = vld [vmem:[%s1 + $0xac] sm:$0xf]
  %v134 = vld [vmem:[%s1 + $0xb0] sm:$0xf]
  %v135 = vld [vmem:[%s1 + $0xb4] sm:$0xf]
  %v136 = vld [vmem:[%s1 + $0xb8] sm:$0xf]
  %v137 = vld [vmem:[%s1 + $0xbc] sm:$0xf]
  %v138 = vld [vmem:[%s1 + $0xc0] sm:$0xf]
  %v139 = vld [vmem:[%s1 + $0xc4] sm:$0xf]
  %v140 = vld [vmem:[%s1 + $0xc8] sm:$0xf]
  %v141 = vld [vmem:[%s1 + $0xcc] sm:$0xf]
  %v142 = vld [vmem:[%s1 + $0xd0] sm:$0xf]
  %v143 = vld [vmem:[%s1 + $0xd4] sm:$0xf]
  %v144 = vld [vmem:[%s1 + $0xd8] sm:$0xf]
  %v145 = vld [vmem:[%s1 + $0xdc] sm:$0xf]
  %v146 = vld [vmem:[%s1 + $0xe0] sm:$0xf]
  %v147 = vld [vmem:[%s1 + $0xe4] sm:$0xf]
  %v148 = vld [vmem:[%s1 + $0xe8] sm:$0xf]
  %v149 = vld [vmem:[%s1 + $0xec] sm:$0xf]
  %v150 = vld [vmem:[%s1 + $0xf0] sm:$0xf]
  %v151 = vld [vmem:[%s1 + $0xf4] sm:$0xf]
  %v152 = vld [vmem:[%s1 + $0xf8] sm:$0xf]
  %v153 = vld [vmem:[%s1 + $0xfc] sm:$0xf]
  %v154 = vld [vmem:[%s1 + $0x100] sm:$0xf]
  %v155 = vld [vmem:[%s1 + $0x104] sm:$0xf]
  %v156 = vld [vmem:[%s1 + $0x108] sm:$0xf]
  %v157 = vld [vmem:[%s1 + $0x10c] sm:$0xf]
  %v158 = vld [vmem:[%s1 + $0x110] sm:$0xf]
  %v159 = vld [vmem:[%s1 + $0x114] sm:$0xf]
  %v160 = vld [vmem:[%s1 + $0x118] sm:$0xf]
  %v161 = vld [vmem:[%s1 + $0x11c] sm:$0xf]
  %v162 = vld [vmem:[%s1 + $0x120] sm:$0xf]
  %v163 = vld [vmem:[%s1 + $0x124] sm:$0xf]
  %v164 = vld [vmem:[%s1 + $0x128] sm:$0xf]
  %v165 = vld [vmem:[%s1 + $0x12c] sm:$0xf]
  %v166 = vld [vmem:[%s1 + $0x130] sm:$0xf]
  %v167 = vld [vmem:[%s1 + $0x134] sm:$0xf]
  %v168 = vld [vmem:[%s1 + $0x138] sm:$0xf]
  %v169 = vld [vmem:[%s1 + $0x13c] sm:$0xf]
  %v170 = vld [vmem:[%s1 + $0x140] sm:$0xf]
  %v171 = vld [vmem:[%s1 + $0x144] sm:$0xf]
  %v172 = vld [vmem:[%s1 + $0x148] sm:$0xf]
  %v173 = vld [vmem:[%s1 + $0x14c] sm:$0xf]
  %v174 = vld [vmem:[%s1 + $0x150] sm:$0xf]
  %v175 = vld [vmem:[%s1 + $0x154] sm:$0xf]
  %v176 = vld [vmem:[%s1 + $0x158] sm:$0xf]
  %v177 = vld [vmem:[%s1 + $0x15c] sm:$0xf]
  %v178 = vld [vmem:[%s1 + $0x160] sm:$0xf]
  %v179 = vld [vmem:[%s1 + $0x164] sm:$0xf]
  %v180 = vld [vmem:[%s1 + $0x168] sm:$0xf]
  %v181 = vld [vmem:[%s1 + $0x16c] sm:$0xf]
  %v182 = vld [vmem:[%s1 + $0x170] sm:$0xf]
  %v183 = vld [vmem:[%s1 + $0x174] sm:$0xf]
  %v184 = vld [vmem:[%s1 + $0x178] sm:$0xf]
  %v185 = vld [vmem:[%s1 + $0x17c] sm:$0xf]
  %v186 = vld [vmem:[%s1 + $0x180] sm:$0xf]
  %v187 = vld [vmem:[%s1 + $0x184] sm:$0xf]
  %v188 = vld [vmem:[%s1 + $0x188] sm:$0xf]
  %v189 = vld [vmem:[%s1 + $0x18c] sm:$0xf]
  %v190 = vld [vmem:[%s1 + $0x190] sm:$0xf]
  %v191 = vld [vmem:[%s1 + $0x194] sm:$0xf]
  %v192 = vld [vmem:[%s1 + $0x198] sm:$0xf]
  %v193 = vld [vmem:[%s1 + $0x19c] sm:$0xf]
  %v194 = vld [vmem:[%s1 + $0x1a0] sm:$0xf]
  %v195 = vld [vmem:[%s1 + $0x1a4] sm:$0xf]
  %v196 = vld [vmem:[%s1 + $0x1a8] sm:$0xf]
  %v197 = vld [vmem:[%s1 + $0x1ac] sm:$0xf]
  %v198 = vld [vmem:[%s1 + $0x1b0] sm:$0xf]
  %v199 = vld [vmem:[%s1 + $0x1b4] sm:$0xf]
  %v200 = vld [vmem:[%s1 + $0x1b8] sm:$0xf]
  %v201 = vld [vmem:[%s1 + $0x1bc] sm:$0xf]
  %v202 = vld [vmem:[%s2] sm:$0x1]
  %v204 = vperm.slane %v202, 0
  %v270 = vunpack.c.l.b16 %v26
  %v271 = vunpack.c.h.b16 %v26
  %v272 = vunpack.c.l.b16 %v27
  %v273 = vunpack.c.h.b16 %v27
  %v274 = vunpack.c.l.b16 %v28
  %v275 = vunpack.c.h.b16 %v28
  %v276 = vunpack.c.l.b16 %v29
  %v277 = vunpack.c.l.b16 %v30
  %v278 = vunpack.c.h.b16 %v30
  %v279 = vunpack.c.l.b16 %v31
  %v280 = vunpack.c.h.b16 %v31
  %v281 = vunpack.c.l.b16 %v32
  %v282 = vunpack.c.h.b16 %v32
  %v283 = vunpack.c.l.b16 %v33
  %v284 = vunpack.c.l.b16 %v34
  %v285 = vunpack.c.h.b16 %v34
  %v286 = vunpack.c.l.b16 %v35
  %v287 = vunpack.c.h.b16 %v35
  %v288 = vunpack.c.l.b16 %v36
  %v289 = vunpack.c.h.b16 %v36
  %v290 = vunpack.c.l.b16 %v37
  %v291 = vunpack.c.l.b16 %v38
  %v292 = vunpack.c.h.b16 %v38
  %v293 = vunpack.c.l.b16 %v39
  %v294 = vunpack.c.h.b16 %v39
  %v295 = vunpack.c.l.b16 %v40
  %v296 = vunpack.c.h.b16 %v40
  %v297 = vunpack.c.l.b16 %v41
  %v298 = vunpack.c.l.b16 %v42
  %v299 = vunpack.c.h.b16 %v42
  %v300 = vunpack.c.l.b16 %v43
  %v301 = vunpack.c.h.b16 %v43
  %v302 = vunpack.c.l.b16 %v44
  %v303 = vunpack.c.h.b16 %v44
  %v304 = vunpack.c.l.b16 %v45
  %v305 = vunpack.c.l.b16 %v46
  %v306 = vunpack.c.h.b16 %v46
  %v307 = vunpack.c.l.b16 %v47
  %v308 = vunpack.c.h.b16 %v47
  %v309 = vunpack.c.l.b16 %v48
  %v310 = vunpack.c.h.b16 %v48
  %v311 = vunpack.c.l.b16 %v49
  %v312 = vunpack.c.l.b16 %v50
  %v313 = vunpack.c.h.b16 %v50
  %v314 = vunpack.c.l.b16 %v51
  %v315 = vunpack.c.h.b16 %v51
  %v316 = vunpack.c.l.b16 %v52
  %v317 = vunpack.c.h.b16 %v52
  %v318 = vunpack.c.l.b16 %v53
  %v319 = vunpack.c.l.b16 %v54
  %v320 = vunpack.c.h.b16 %v54
  %v321 = vunpack.c.l.b16 %v55
  %v322 = vunpack.c.h.b16 %v55
  %v323 = vunpack.c.l.b16 %v56
  %v324 = vunpack.c.h.b16 %v56
  %v325 = vunpack.c.l.b16 %v57
  %v326 = vunpack.c.l.b16 %v58
  %v327 = vunpack.c.h.b16 %v58
  %v328 = vunpack.c.l.b16 %v59
  %v329 = vunpack.c.h.b16 %v59
  %v330 = vunpack.c.l.b16 %v60
  %v331 = vunpack.c.h.b16 %v60
  %v332 = vunpack.c.l.b16 %v61
  %v333 = vunpack.c.l.b16 %v62
  %v334 = vunpack.c.h.b16 %v62
  %v335 = vunpack.c.l.b16 %v63
  %v336 = vunpack.c.h.b16 %v63
  %v337 = vunpack.c.l.b16 %v64
  %v338 = vunpack.c.h.b16 %v64
  %v339 = vunpack.c.l.b16 %v65
  %v340 = vunpack.c.l.b16 %v66
  %v341 = vunpack.c.h.b16 %v66
  %v342 = vunpack.c.l.b16 %v67
  %v343 = vunpack.c.h.b16 %v67
  %v344 = vunpack.c.l.b16 %v68
  %v345 = vunpack.c.h.b16 %v68
  %v346 = vunpack.c.l.b16 %v69
  %v347 = vunpack.c.l.b16 %v70
  %v348 = vunpack.c.h.b16 %v70
  %v349 = vunpack.c.l.b16 %v71
  %v350 = vunpack.c.h.b16 %v71
  %v351 = vunpack.c.l.b16 %v72
  %v352 = vunpack.c.h.b16 %v72
  %v353 = vunpack.c.l.b16 %v73
  %v354 = vunpack.c.l.b16 %v74
  %v355 = vunpack.c.h.b16 %v74
  %v356 = vunpack.c.l.b16 %v75
  %v357 = vunpack.c.h.b16 %v75
  %v358 = vunpack.c.l.b16 %v76
  %v359 = vunpack.c.h.b16 %v76
  %v360 = vunpack.c.l.b16 %v77
  %v361 = vunpack.c.l.b16 %v78
  %v362 = vunpack.c.h.b16 %v78
  %v363 = vunpack.c.l.b16 %v79
  %v364 = vunpack.c.h.b16 %v79
  %v365 = vunpack.c.l.b16 %v80
  %v366 = vunpack.c.h.b16 %v80
  %v367 = vunpack.c.l.b16 %v81
  %v368 = vunpack.c.l.b16 %v82
  %v369 = vunpack.c.h.b16 %v82
  %v370 = vunpack.c.l.b16 %v83
  %v371 = vunpack.c.h.b16 %v83
  %v372 = vunpack.c.l.b16 %v84
  %v373 = vunpack.c.h.b16 %v84
  %v374 = vunpack.c.l.b16 %v85
  %v375 = vunpack.c.l.b16 %v86
  %v376 = vunpack.c.h.b16 %v86
  %v377 = vunpack.c.l.b16 %v87
  %v378 = vunpack.c.h.b16 %v87
  %v379 = vunpack.c.l.b16 %v88
  %v380 = vunpack.c.h.b16 %v88
  %v381 = vunpack.c.l.b16 %v89
  %v382 = vpack.c.b16 %v277, %v270
  %v383 = vpack.c.b16 %v278, %v271
  %v384 = vpack.c.b16 %v279, %v272
  %v385 = vpack.c.b16 %v280, %v273
  %v386 = vpack.c.b16 %v281, %v274
  %v387 = vpack.c.b16 %v282, %v275
  %v388 = vpack.c.b16 %v283, %v276
  %v389 = vpack.c.b16 %v291, %v284
  %v390 = vpack.c.b16 %v292, %v285
  %v391 = vpack.c.b16 %v293, %v286
  %v392 = vpack.c.b16 %v294, %v287
  %v393 = vpack.c.b16 %v295, %v288
  %v394 = vpack.c.b16 %v296, %v289
  %v395 = vpack.c.b16 %v297, %v290
  %v396 = vpack.c.b16 %v305, %v298
  %v397 = vpack.c.b16 %v306, %v299
  %v398 = vpack.c.b16 %v307, %v300
  %v399 = vpack.c.b16 %v308, %v301
  %v400 = vpack.c.b16 %v309, %v302
  %v401 = vpack.c.b16 %v310, %v303
  %v402 = vpack.c.b16 %v311, %v304
  %v403 = vpack.c.b16 %v319, %v312
  %v404 = vpack.c.b16 %v320, %v313
  %v405 = vpack.c.b16 %v321, %v314
  %v406 = vpack.c.b16 %v322, %v315
  %v407 = vpack.c.b16 %v323, %v316
  %v408 = vpack.c.b16 %v324, %v317
  %v409 = vpack.c.b16 %v325, %v318
  %v410 = vpack.c.b16 %v333, %v326
  %v411 = vpack.c.b16 %v334, %v327
  %v412 = vpack.c.b16 %v335, %v328
  %v413 = vpack.c.b16 %v336, %v329
  %v414 = vpack.c.b16 %v337, %v330
  %v415 = vpack.c.b16 %v338, %v331
  %v416 = vpack.c.b16 %v339, %v332
  %v417 = vpack.c.b16 %v347, %v340
  %v418 = vpack.c.b16 %v348, %v341
  %v419 = vpack.c.b16 %v349, %v342
  %v420 = vpack.c.b16 %v350, %v343
  %v421 = vpack.c.b16 %v351, %v344
  %v422 = vpack.c.b16 %v352, %v345
  %v423 = vpack.c.b16 %v353, %v346
  %v424 = vpack.c.b16 %v361, %v354
  %v425 = vpack.c.b16 %v362, %v355
  %v426 = vpack.c.b16 %v363, %v356
  %v427 = vpack.c.b16 %v364, %v357
  %v428 = vpack.c.b16 %v365, %v358
  %v429 = vpack.c.b16 %v366, %v359
  %v430 = vpack.c.b16 %v367, %v360
  %v431 = vpack.c.b16 %v375, %v368
  %v432 = vpack.c.b16 %v376, %v369
  %v433 = vpack.c.b16 %v377, %v370
  %v434 = vpack.c.b16 %v378, %v371
  %v435 = vpack.c.b16 %v379, %v372
  %v436 = vpack.c.b16 %v380, %v373
  %v437 = vpack.c.b16 %v381, %v374
  %v606 = vunpack.c.l.b16 %v90
  %v607 = vunpack.c.l.b16 %v91
  %v608 = vunpack.c.l.b16 %v92
  %v609 = vunpack.c.l.b16 %v93
  %v610 = vunpack.c.l.b16 %v94
  %v611 = vunpack.c.l.b16 %v95
  %v612 = vunpack.c.l.b16 %v96
  %v613 = vunpack.c.l.b16 %v97
  %v614 = vunpack.c.l.b16 %v98
  %v615 = vunpack.c.l.b16 %v99
  %v616 = vunpack.c.l.b16 %v100
  %v617 = vunpack.c.l.b16 %v101
  %v618 = vunpack.c.l.b16 %v102
  %v619 = vunpack.c.l.b16 %v103
  %v620 = vunpack.c.l.b16 %v104
  %v621 = vunpack.c.l.b16 %v105
  %v622 = vunpack.c.l.b16 %v106
  %v623 = vunpack.c.l.b16 %v107
  %v624 = vunpack.c.l.b16 %v108
  %v625 = vunpack.c.l.b16 %v109
  %v626 = vunpack.c.l.b16 %v110
  %v627 = vunpack.c.l.b16 %v111
  %v628 = vunpack.c.l.b16 %v112
  %v629 = vunpack.c.l.b16 %v113
  %v630 = vunpack.c.l.b16 %v114
  %v631 = vunpack.c.l.b16 %v115
  %v632 = vunpack.c.l.b16 %v116
  %v633 = vunpack.c.l.b16 %v117
  %v634 = vunpack.c.l.b16 %v118
  %v635 = vunpack.c.l.b16 %v119
  %v636 = vunpack.c.l.b16 %v120
  %v637 = vunpack.c.l.b16 %v121
  %v638 = vunpack.c.l.b16 %v122
  %v639 = vunpack.c.l.b16 %v123
  %v640 = vunpack.c.l.b16 %v124
  %v641 = vunpack.c.l.b16 %v125
  %v642 = vunpack.c.l.b16 %v126
  %v643 = vunpack.c.l.b16 %v127
  %v644 = vunpack.c.l.b16 %v128
  %v645 = vunpack.c.l.b16 %v129
  %v646 = vunpack.c.l.b16 %v130
  %v647 = vunpack.c.l.b16 %v131
  %v648 = vunpack.c.l.b16 %v132
  %v649 = vunpack.c.l.b16 %v133
  %v650 = vunpack.c.l.b16 %v134
  %v651 = vunpack.c.l.b16 %v135
  %v652 = vunpack.c.l.b16 %v136
  %v653 = vunpack.c.l.b16 %v137
  %v654 = vunpack.c.l.b16 %v138
  %v655 = vunpack.c.l.b16 %v139
  %v656 = vunpack.c.l.b16 %v140
  %v657 = vunpack.c.l.b16 %v141
  %v658 = vunpack.c.l.b16 %v142
  %v659 = vunpack.c.l.b16 %v143
  %v660 = vunpack.c.l.b16 %v144
  %v661 = vunpack.c.l.b16 %v145
  %v662 = vunpack.c.l.b16 %v146
  %v663 = vunpack.c.l.b16 %v147
  %v664 = vunpack.c.l.b16 %v148
  %v665 = vunpack.c.l.b16 %v149
  %v666 = vunpack.c.l.b16 %v150
  %v667 = vunpack.c.l.b16 %v151
  %v668 = vunpack.c.l.b16 %v152
  %v669 = vunpack.c.l.b16 %v153
  %v670 = vunpack.c.l.b16 %v154
  %v671 = vunpack.c.l.b16 %v155
  %v672 = vunpack.c.l.b16 %v156
  %v673 = vunpack.c.l.b16 %v157
  %v674 = vunpack.c.l.b16 %v158
  %v675 = vunpack.c.l.b16 %v159
  %v676 = vunpack.c.l.b16 %v160
  %v677 = vunpack.c.l.b16 %v161
  %v678 = vunpack.c.l.b16 %v162
  %v679 = vunpack.c.l.b16 %v163
  %v680 = vunpack.c.l.b16 %v164
  %v681 = vunpack.c.l.b16 %v165
  %v682 = vunpack.c.l.b16 %v166
  %v683 = vunpack.c.l.b16 %v167
  %v684 = vunpack.c.l.b16 %v168
  %v685 = vunpack.c.l.b16 %v169
  %v686 = vunpack.c.l.b16 %v170
  %v687 = vunpack.c.l.b16 %v171
  %v688 = vunpack.c.l.b16 %v172
  %v689 = vunpack.c.l.b16 %v173
  %v690 = vunpack.c.l.b16 %v174
  %v691 = vunpack.c.l.b16 %v175
  %v692 = vunpack.c.l.b16 %v176
  %v693 = vunpack.c.l.b16 %v177
  %v694 = vunpack.c.l.b16 %v178
  %v695 = vunpack.c.l.b16 %v179
  %v696 = vunpack.c.l.b16 %v180
  %v697 = vunpack.c.l.b16 %v181
  %v698 = vunpack.c.l.b16 %v182
  %v699 = vunpack.c.l.b16 %v183
  %v700 = vunpack.c.l.b16 %v184
  %v701 = vunpack.c.l.b16 %v185
  %v702 = vunpack.c.l.b16 %v186
  %v703 = vunpack.c.l.b16 %v187
  %v704 = vunpack.c.l.b16 %v188
  %v705 = vunpack.c.l.b16 %v189
  %v706 = vunpack.c.l.b16 %v190
  %v707 = vunpack.c.l.b16 %v191
  %v708 = vunpack.c.l.b16 %v192
  %v709 = vunpack.c.l.b16 %v193
  %v710 = vunpack.c.l.b16 %v194
  %v711 = vunpack.c.l.b16 %v195
  %v712 = vunpack.c.l.b16 %v196
  %v713 = vunpack.c.l.b16 %v197
  %v714 = vunpack.c.l.b16 %v198
  %v715 = vunpack.c.l.b16 %v199
  %v716 = vunpack.c.l.b16 %v200
  %v717 = vunpack.c.l.b16 %v201
  %v718 = vpack.c.b16 %v607, %v606
  %v719 = vpack.c.b16 %v609, %v608
  %v720 = vpack.c.b16 %v611, %v610
  %v721 = vpack.c.b16 %v613, %v612
  %v722 = vpack.c.b16 %v615, %v614
  %v723 = vpack.c.b16 %v617, %v616
  %v724 = vpack.c.b16 %v619, %v618
  %v725 = vpack.c.b16 %v621, %v620
  %v726 = vpack.c.b16 %v623, %v622
  %v727 = vpack.c.b16 %v625, %v624
  %v728 = vpack.c.b16 %v627, %v626
  %v729 = vpack.c.b16 %v629, %v628
  %v730 = vpack.c.b16 %v631, %v630
  %v731 = vpack.c.b16 %v633, %v632
  %v732 = vpack.c.b16 %v635, %v634
  %v733 = vpack.c.b16 %v637, %v636
  %v734 = vpack.c.b16 %v639, %v638
  %v735 = vpack.c.b16 %v641, %v640
  %v736 = vpack.c.b16 %v643, %v642
  %v737 = vpack.c.b16 %v645, %v644
  %v738 = vpack.c.b16 %v647, %v646
  %v739 = vpack.c.b16 %v649, %v648
  %v740 = vpack.c.b16 %v651, %v650
  %v741 = vpack.c.b16 %v653, %v652
  %v742 = vpack.c.b16 %v655, %v654
  %v743 = vpack.c.b16 %v657, %v656
  %v744 = vpack.c.b16 %v659, %v658
  %v745 = vpack.c.b16 %v661, %v660
  %v746 = vpack.c.b16 %v663, %v662
  %v747 = vpack.c.b16 %v665, %v664
  %v748 = vpack.c.b16 %v667, %v666
  %v749 = vpack.c.b16 %v669, %v668
  %v750 = vpack.c.b16 %v671, %v670
  %v751 = vpack.c.b16 %v673, %v672
  %v752 = vpack.c.b16 %v675, %v674
  %v753 = vpack.c.b16 %v677, %v676
  %v754 = vpack.c.b16 %v679, %v678
  %v755 = vpack.c.b16 %v681, %v680
  %v756 = vpack.c.b16 %v683, %v682
  %v757 = vpack.c.b16 %v685, %v684
  %v758 = vpack.c.b16 %v687, %v686
  %v759 = vpack.c.b16 %v689, %v688
  %v760 = vpack.c.b16 %v691, %v690
  %v761 = vpack.c.b16 %v693, %v692
  %v762 = vpack.c.b16 %v695, %v694
  %v763 = vpack.c.b16 %v697, %v696
  %v764 = vpack.c.b16 %v699, %v698
  %v765 = vpack.c.b16 %v701, %v700
  %v766 = vpack.c.b16 %v703, %v702
  %v767 = vpack.c.b16 %v705, %v704
  %v768 = vpack.c.b16 %v707, %v706
  %v769 = vpack.c.b16 %v709, %v708
  %v770 = vpack.c.b16 %v711, %v710
  %v771 = vpack.c.b16 %v713, %v712
  %v772 = vpack.c.b16 %v715, %v714
  %v773 = vpack.c.b16 %v717, %v716
  %830 = vmatpush.bf16.msra.mxu0 %v725
  %831 = vmatpush.bf16.msra.mxu0 %v724
  %832 = vmatpush.bf16.msra.mxu0 %v723
  %833 = vmatpush.bf16.msra.mxu0 %v722
  %834 = vmatpush.bf16.msra.mxu0 %v721
  %835 = vmatpush.bf16.msra.mxu0 %v720
  %836 = vmatpush.bf16.msra.mxu0 %v719
  %837 = vmatpush.bf16.msra.mxu0 %v718
  %838 = vmatmul.bf16.gmra.mxu0 %v382
  %v839 = vpop.f32.mrf.mxu0
  %v840 = vadd.f32 %v204, %v839
  %v841 = vpop.f32.mrf.mxu0
  %v842 = vadd.f32 %v204, %v841
  %843 = vmatmul.bf16.gmra.mxu0 %v389
  %v844 = vpop.f32.mrf.mxu0
  %v845 = vadd.f32 %v204, %v844
  %v846 = vpop.f32.mrf.mxu0
  %v847 = vadd.f32 %v204, %v846
  %848 = vmatmul.bf16.gmra.mxu0 %v396
  %v849 = vpop.f32.mrf.mxu0
  %v850 = vadd.f32 %v204, %v849
  %v851 = vpop.f32.mrf.mxu0
  %v852 = vadd.f32 %v204, %v851
  %853 = vmatmul.bf16.gmra.mxu0 %v403
  %v854 = vpop.f32.mrf.mxu0
  %v855 = vadd.f32 %v204, %v854
  %v856 = vpop.f32.mrf.mxu0
  %v857 = vadd.f32 %v204, %v856
  %858 = vmatmul.bf16.gmra.mxu0 %v410
  %v859 = vpop.f32.mrf.mxu0
  %v860 = vadd.f32 %v204, %v859
  %v861 = vpop.f32.mrf.mxu0
  %v862 = vadd.f32 %v204, %v861
  %863 = vmatmul.bf16.gmra.mxu0 %v417
  %v864 = vpop.f32.mrf.mxu0
  %v865 = vadd.f32 %v204, %v864
  %v866 = vpop.f32.mrf.mxu0
  %v867 = vadd.f32 %v204, %v866
  %868 = vmatmul.bf16.gmra.mxu0 %v424
  %v869 = vpop.f32.mrf.mxu0
  %v870 = vadd.f32 %v204, %v869
  %v871 = vpop.f32.mrf.mxu0
  %v872 = vadd.f32 %v204, %v871
  %873 = vmatmul.bf16.gmra.mxu0 %v431
  %v874 = vpop.f32.mrf.mxu0
  %v875 = vadd.f32 %v204, %v874
  %v876 = vpop.f32.mrf.mxu0
  %v877 = vadd.f32 %v204, %v876
  %878 = vdwg.mxu0
  %879 = vmatpush.bf16.msra.mxu0 %v733
  %880 = vmatpush.bf16.msra.mxu0 %v732
  %881 = vmatpush.bf16.msra.mxu0 %v731
  %882 = vmatpush.bf16.msra.mxu0 %v730
  %883 = vmatpush.bf16.msra.mxu0 %v729
  %884 = vmatpush.bf16.msra.mxu0 %v728
  %885 = vmatpush.bf16.msra.mxu0 %v727
  %886 = vmatpush.bf16.msra.mxu0 %v726
  %887 = vmatmul.bf16.gmra.mxu0 %v383
  %v888 = vpop.f32.mrf.mxu0
  %v889 = vadd.f32 %v840, %v888
  %v890 = vpop.f32.mrf.mxu0
  %v891 = vadd.f32 %v842, %v890
  %892 = vmatmul.bf16.gmra.mxu0 %v390
  %v893 = vpop.f32.mrf.mxu0
  %v894 = vadd.f32 %v845, %v893
  %v895 = vpop.f32.mrf.mxu0
  %v896 = vadd.f32 %v847, %v895
  %897 = vmatmul.bf16.gmra.mxu0 %v397
  %v898 = vpop.f32.mrf.mxu0
  %v899 = vadd.f32 %v850, %v898
  %v900 = vpop.f32.mrf.mxu0
  %v901 = vadd.f32 %v852, %v900
  %902 = vmatmul.bf16.gmra.mxu0 %v404
  %v903 = vpop.f32.mrf.mxu0
  %v904 = vadd.f32 %v855, %v903
  %v905 = vpop.f32.mrf.mxu0
  %v906 = vadd.f32 %v857, %v905
  %907 = vmatmul.bf16.gmra.mxu0 %v411
  %v908 = vpop.f32.mrf.mxu0
  %v909 = vadd.f32 %v860, %v908
  %v910 = vpop.f32.mrf.mxu0
  %v911 = vadd.f32 %v862, %v910
  %912 = vmatmul.bf16.gmra.mxu0 %v418
  %v913 = vpop.f32.mrf.mxu0
  %v914 = vadd.f32 %v865, %v913
  %v915 = vpop.f32.mrf.mxu0
  %v916 = vadd.f32 %v867, %v915
  %917 = vmatmul.bf16.gmra.mxu0 %v425
  %v918 = vpop.f32.mrf.mxu0
  %v919 = vadd.f32 %v870, %v918
  %v920 = vpop.f32.mrf.mxu0
  %v921 = vadd.f32 %v872, %v920
  %922 = vmatmul.bf16.gmra.mxu0 %v432
  %v923 = vpop.f32.mrf.mxu0
  %v924 = vadd.f32 %v875, %v923
  %v925 = vpop.f32.mrf.mxu0
  %v926 = vadd.f32 %v877, %v925
  %927 = vdwg.mxu0
  %928 = vmatpush.bf16.msra.mxu0 %v741
  %929 = vmatpush.bf16.msra.mxu0 %v740
  %930 = vmatpush.bf16.msra.mxu0 %v739
  %931 = vmatpush.bf16.msra.mxu0 %v738
  %932 = vmatpush.bf16.msra.mxu0 %v737
  %933 = vmatpush.bf16.msra.mxu0 %v736
  %934 = vmatpush.bf16.msra.mxu0 %v735
  %935 = vmatpush.bf16.msra.mxu0 %v734
  %936 = vmatmul.bf16.gmra.mxu0 %v384
  %v937 = vpop.f32.mrf.mxu0
  %v938 = vadd.f32 %v889, %v937
  %v939 = vpop.f32.mrf.mxu0
  %v940 = vadd.f32 %v891, %v939
  %941 = vmatmul.bf16.gmra.mxu0 %v391
  %v942 = vpop.f32.mrf.mxu0
  %v943 = vadd.f32 %v894, %v942
  %v944 = vpop.f32.mrf.mxu0
  %v945 = vadd.f32 %v896, %v944
  %946 = vmatmul.bf16.gmra.mxu0 %v398
  %v947 = vpop.f32.mrf.mxu0
  %v948 = vadd.f32 %v899, %v947
  %v949 = vpop.f32.mrf.mxu0
  %v950 = vadd.f32 %v901, %v949
  %951 = vmatmul.bf16.gmra.mxu0 %v405
  %v952 = vpop.f32.mrf.mxu0
  %v953 = vadd.f32 %v904, %v952
  %v954 = vpop.f32.mrf.mxu0
  %v955 = vadd.f32 %v906, %v954
  %956 = vmatmul.bf16.gmra.mxu0 %v412
  %v957 = vpop.f32.mrf.mxu0
  %v958 = vadd.f32 %v909, %v957
  %v959 = vpop.f32.mrf.mxu0
  %v960 = vadd.f32 %v911, %v959
  %961 = vmatmul.bf16.gmra.mxu0 %v419
  %v962 = vpop.f32.mrf.mxu0
  %v963 = vadd.f32 %v914, %v962
  %v964 = vpop.f32.mrf.mxu0
  %v965 = vadd.f32 %v916, %v964
  %966 = vmatmul.bf16.gmra.mxu0 %v426
  %v967 = vpop.f32.mrf.mxu0
  %v968 = vadd.f32 %v919, %v967
  %v969 = vpop.f32.mrf.mxu0
  %v970 = vadd.f32 %v921, %v969
  %971 = vmatmul.bf16.gmra.mxu0 %v433
  %v972 = vpop.f32.mrf.mxu0
  %v973 = vadd.f32 %v924, %v972
  %v974 = vpop.f32.mrf.mxu0
  %v975 = vadd.f32 %v926, %v974
  %976 = vdwg.mxu0
  %977 = vmatpush.bf16.msra.mxu0 %v749
  %978 = vmatpush.bf16.msra.mxu0 %v748
  %979 = vmatpush.bf16.msra.mxu0 %v747
  %980 = vmatpush.bf16.msra.mxu0 %v746
  %981 = vmatpush.bf16.msra.mxu0 %v745
  %982 = vmatpush.bf16.msra.mxu0 %v744
  %983 = vmatpush.bf16.msra.mxu0 %v743
  %984 = vmatpush.bf16.msra.mxu0 %v742
  %985 = vmatmul.bf16.gmra.mxu0 %v385
  %v986 = vpop.f32.mrf.mxu0
  %v987 = vadd.f32 %v938, %v986
  %v988 = vpop.f32.mrf.mxu0
  %v989 = vadd.f32 %v940, %v988
  %990 = vmatmul.bf16.gmra.mxu0 %v392
  %v991 = vpop.f32.mrf.mxu0
  %v992 = vadd.f32 %v943, %v991
  %v993 = vpop.f32.mrf.mxu0
  %v994 = vadd.f32 %v945, %v993
  %995 = vmatmul.bf16.gmra.mxu0 %v399
  %v996 = vpop.f32.mrf.mxu0
  %v997 = vadd.f32 %v948, %v996
  %v998 = vpop.f32.mrf.mxu0
  %v999 = vadd.f32 %v950, %v998
  %1000 = vmatmul.bf16.gmra.mxu0 %v406
  %v1001 = vpop.f32.mrf.mxu0
  %v1002 = vadd.f32 %v953, %v1001
  %v1003 = vpop.f32.mrf.mxu0
  %v1004 = vadd.f32 %v955, %v1003
  %1005 = vmatmul.bf16.gmra.mxu0 %v413
  %v1006 = vpop.f32.mrf.mxu0
  %v1007 = vadd.f32 %v958, %v1006
  %v1008 = vpop.f32.mrf.mxu0
  %v1009 = vadd.f32 %v960, %v1008
  %1010 = vmatmul.bf16.gmra.mxu0 %v420
  %v1011 = vpop.f32.mrf.mxu0
  %v1012 = vadd.f32 %v963, %v1011
  %v1013 = vpop.f32.mrf.mxu0
  %v1014 = vadd.f32 %v965, %v1013
  %1015 = vmatmul.bf16.gmra.mxu0 %v427
  %v1016 = vpop.f32.mrf.mxu0
  %v1017 = vadd.f32 %v968, %v1016
  %v1018 = vpop.f32.mrf.mxu0
  %v1019 = vadd.f32 %v970, %v1018
  %1020 = vmatmul.bf16.gmra.mxu0 %v434
  %v1021 = vpop.f32.mrf.mxu0
  %v1022 = vadd.f32 %v973, %v1021
  %v1023 = vpop.f32.mrf.mxu0
  %v1024 = vadd.f32 %v975, %v1023
  %1025 = vdwg.mxu0
  %1026 = vmatpush.bf16.msra.mxu0 %v757
  %1027 = vmatpush.bf16.msra.mxu0 %v756
  %1028 = vmatpush.bf16.msra.mxu0 %v755
  %1029 = vmatpush.bf16.msra.mxu0 %v754
  %1030 = vmatpush.bf16.msra.mxu0 %v753
  %1031 = vmatpush.bf16.msra.mxu0 %v752
  %1032 = vmatpush.bf16.msra.mxu0 %v751
  %1033 = vmatpush.bf16.msra.mxu0 %v750
  %1034 = vmatmul.bf16.gmra.mxu0 %v386
  %v1035 = vpop.f32.mrf.mxu0
  %v1036 = vadd.f32 %v987, %v1035
  %v1037 = vpop.f32.mrf.mxu0
  %v1038 = vadd.f32 %v989, %v1037
  %1039 = vmatmul.bf16.gmra.mxu0 %v393
  %v1040 = vpop.f32.mrf.mxu0
  %v1041 = vadd.f32 %v992, %v1040
  %v1042 = vpop.f32.mrf.mxu0
  %v1043 = vadd.f32 %v994, %v1042
  %1044 = vmatmul.bf16.gmra.mxu0 %v400
  %v1045 = vpop.f32.mrf.mxu0
  %v1046 = vadd.f32 %v997, %v1045
  %v1047 = vpop.f32.mrf.mxu0
  %v1048 = vadd.f32 %v999, %v1047
  %1049 = vmatmul.bf16.gmra.mxu0 %v407
  %v1050 = vpop.f32.mrf.mxu0
  %v1051 = vadd.f32 %v1002, %v1050
  %v1052 = vpop.f32.mrf.mxu0
  %v1053 = vadd.f32 %v1004, %v1052
  %1054 = vmatmul.bf16.gmra.mxu0 %v414
  %v1055 = vpop.f32.mrf.mxu0
  %v1056 = vadd.f32 %v1007, %v1055
  %v1057 = vpop.f32.mrf.mxu0
  %v1058 = vadd.f32 %v1009, %v1057
  %1059 = vmatmul.bf16.gmra.mxu0 %v421
  %v1060 = vpop.f32.mrf.mxu0
  %v1061 = vadd.f32 %v1012, %v1060
  %v1062 = vpop.f32.mrf.mxu0
  %v1063 = vadd.f32 %v1014, %v1062
  %1064 = vmatmul.bf16.gmra.mxu0 %v428
  %v1065 = vpop.f32.mrf.mxu0
  %v1066 = vadd.f32 %v1017, %v1065
  %v1067 = vpop.f32.mrf.mxu0
  %v1068 = vadd.f32 %v1019, %v1067
  %1069 = vmatmul.bf16.gmra.mxu0 %v435
  %v1070 = vpop.f32.mrf.mxu0
  %v1071 = vadd.f32 %v1022, %v1070
  %v1072 = vpop.f32.mrf.mxu0
  %v1073 = vadd.f32 %v1024, %v1072
  %1074 = vdwg.mxu0
  %1075 = vmatpush.bf16.msra.mxu0 %v765
  %1076 = vmatpush.bf16.msra.mxu0 %v764
  %1077 = vmatpush.bf16.msra.mxu0 %v763
  %1078 = vmatpush.bf16.msra.mxu0 %v762
  %1079 = vmatpush.bf16.msra.mxu0 %v761
  %1080 = vmatpush.bf16.msra.mxu0 %v760
  %1081 = vmatpush.bf16.msra.mxu0 %v759
  %1082 = vmatpush.bf16.msra.mxu0 %v758
  %1083 = vmatmul.bf16.gmra.mxu0 %v387
  %v1084 = vpop.f32.mrf.mxu0
  %v1085 = vadd.f32 %v1036, %v1084
  %v1086 = vpop.f32.mrf.mxu0
  %v1087 = vadd.f32 %v1038, %v1086
  %1088 = vmatmul.bf16.gmra.mxu0 %v394
  %v1089 = vpop.f32.mrf.mxu0
  %v1090 = vadd.f32 %v1041, %v1089
  %v1091 = vpop.f32.mrf.mxu0
  %v1092 = vadd.f32 %v1043, %v1091
  %1093 = vmatmul.bf16.gmra.mxu0 %v401
  %v1094 = vpop.f32.mrf.mxu0
  %v1095 = vadd.f32 %v1046, %v1094
  %v1096 = vpop.f32.mrf.mxu0
  %v1097 = vadd.f32 %v1048, %v1096
  %1098 = vmatmul.bf16.gmra.mxu0 %v408
  %v1099 = vpop.f32.mrf.mxu0
  %v1100 = vadd.f32 %v1051, %v1099
  %v1101 = vpop.f32.mrf.mxu0
  %v1102 = vadd.f32 %v1053, %v1101
  %1103 = vmatmul.bf16.gmra.mxu0 %v415
  %v1104 = vpop.f32.mrf.mxu0
  %v1105 = vadd.f32 %v1056, %v1104
  %v1106 = vpop.f32.mrf.mxu0
  %v1107 = vadd.f32 %v1058, %v1106
  %1108 = vmatmul.bf16.gmra.mxu0 %v422
  %v1109 = vpop.f32.mrf.mxu0
  %v1110 = vadd.f32 %v1061, %v1109
  %v1111 = vpop.f32.mrf.mxu0
  %v1112 = vadd.f32 %v1063, %v1111
  %1113 = vmatmul.bf16.gmra.mxu0 %v429
  %v1114 = vpop.f32.mrf.mxu0
  %v1115 = vadd.f32 %v1066, %v1114
  %v1116 = vpop.f32.mrf.mxu0
  %v1117 = vadd.f32 %v1068, %v1116
  %1118 = vmatmul.bf16.gmra.mxu0 %v436
  %v1119 = vpop.f32.mrf.mxu0
  %v1120 = vadd.f32 %v1071, %v1119
  %v1121 = vpop.f32.mrf.mxu0
  %v1122 = vadd.f32 %v1073, %v1121
  %1123 = vdwg.mxu0
  %1124 = vmatpush.bf16.msra.mxu0 %v773
  %1125 = vmatpush.bf16.msra.mxu0 %v772
  %1126 = vmatpush.bf16.msra.mxu0 %v771
  %1127 = vmatpush.bf16.msra.mxu0 %v770
  %1128 = vmatpush.bf16.msra.mxu0 %v769
  %1129 = vmatpush.bf16.msra.mxu0 %v768
  %1130 = vmatpush.bf16.msra.mxu0 %v767
  %1131 = vmatpush.bf16.msra.mxu0 %v766
  %1132 = vmatmul.bf16.gmra.mxu0 %v388
  %v1133 = vpop.f32.mrf.mxu0
  %v1134 = vadd.f32 %v1085, %v1133
  %v1135 = vpop.f32.mrf.mxu0
  %v1136 = vadd.f32 %v1087, %v1135
  %1137 = vmatmul.bf16.gmra.mxu0 %v395
  %v1138 = vpop.f32.mrf.mxu0
  %v1139 = vadd.f32 %v1090, %v1138
  %v1140 = vpop.f32.mrf.mxu0
  %v1141 = vadd.f32 %v1092, %v1140
  %1142 = vmatmul.bf16.gmra.mxu0 %v402
  %v1143 = vpop.f32.mrf.mxu0
  %v1144 = vadd.f32 %v1095, %v1143
  %v1145 = vpop.f32.mrf.mxu0
  %v1146 = vadd.f32 %v1097, %v1145
  %1147 = vmatmul.bf16.gmra.mxu0 %v409
  %v1148 = vpop.f32.mrf.mxu0
  %v1149 = vadd.f32 %v1100, %v1148
  %v1150 = vpop.f32.mrf.mxu0
  %v1151 = vadd.f32 %v1102, %v1150
  %1152 = vmatmul.bf16.gmra.mxu0 %v416
  %v1153 = vpop.f32.mrf.mxu0
  %v1154 = vadd.f32 %v1105, %v1153
  %v1155 = vpop.f32.mrf.mxu0
  %v1156 = vadd.f32 %v1107, %v1155
  %1157 = vmatmul.bf16.gmra.mxu0 %v423
  %v1158 = vpop.f32.mrf.mxu0
  %v1159 = vadd.f32 %v1110, %v1158
  %v1160 = vpop.f32.mrf.mxu0
  %v1161 = vadd.f32 %v1112, %v1160
  %1162 = vmatmul.bf16.gmra.mxu0 %v430
  %v1163 = vpop.f32.mrf.mxu0
  %v1164 = vadd.f32 %v1115, %v1163
  %v1165 = vpop.f32.mrf.mxu0
  %v1166 = vadd.f32 %v1117, %v1165
  %1167 = vmatmul.bf16.gmra.mxu0 %v437
  %v1168 = vpop.f32.mrf.mxu0
  %v1169 = vadd.f32 %v1120, %v1168
  %v1170 = vpop.f32.mrf.mxu0
  %v1171 = vadd.f32 %v1122, %v1170
  %1172 = vdwg.mxu0
  %v1173 = vmax.f32 %v1134, 0.0
  %v1174 = vmax.f32 %v1136, 0.0
  %v1175 = vmax.f32 %v1139, 0.0
  %v1176 = vmax.f32 %v1141, 0.0
  %v1177 = vmax.f32 %v1144, 0.0
  %v1178 = vmax.f32 %v1146, 0.0
  %v1179 = vmax.f32 %v1149, 0.0
  %v1180 = vmax.f32 %v1151, 0.0
  %v1181 = vmax.f32 %v1154, 0.0
  %v1182 = vmax.f32 %v1156, 0.0
  %v1183 = vmax.f32 %v1159, 0.0
  %v1184 = vmax.f32 %v1161, 0.0
  %v1185 = vmax.f32 %v1164, 0.0
  %v1186 = vmax.f32 %v1166, 0.0
  %v1187 = vmax.f32 %v1169, 0.0
  %v1188 = vmax.f32 %v1171, 0.0
  %v1189 = vpack.c.bf16 %v1174, %v1173
  %v1190 = vpack.c.bf16 %v1176, %v1175
  %v1191 = vpack.c.bf16 %v1178, %v1177
  %v1192 = vpack.c.bf16 %v1180, %v1179
  %v1193 = vpack.c.bf16 %v1182, %v1181
  %v1194 = vpack.c.bf16 %v1184, %v1183
  %v1195 = vpack.c.bf16 %v1186, %v1185
  %v1196 = vpack.c.bf16 %v1188, %v1187
  %v1197 = vld [vmem:[%s3] sm:$0xf]
  %v1198 = vld [vmem:[%s3 + $0x4] sm:$0xf]
  %v1199 = vld [vmem:[%s3 + $0x8] sm:$0xf]
  %v1200 = vld [vmem:[%s3 + $0xc] sm:$0xf]
  %v1201 = vld [vmem:[%s3 + $0x10] sm:$0xf]
  %v1202 = vld [vmem:[%s3 + $0x14] sm:$0xf]
  %v1203 = vld [vmem:[%s3 + $0x18] sm:$0xf]
  %v1204 = vld [vmem:[%s3 + $0x1c] sm:$0xf]
  %v1205 = vld [vmem:[%s3 + $0x20] sm:$0xf]
  %v1206 = vld [vmem:[%s3 + $0x24] sm:$0xf]
  %v1207 = vld [vmem:[%s3 + $0x28] sm:$0xf]
  %v1208 = vld [vmem:[%s3 + $0x2c] sm:$0xf]
  %v1209 = vld [vmem:[%s3 + $0x30] sm:$0xf]
  %v1210 = vld [vmem:[%s3 + $0x34] sm:$0xf]
  %v1211 = vld [vmem:[%s3 + $0x38] sm:$0xf]
  %v1212 = vld [vmem:[%s3 + $0x3c] sm:$0xf]
  %v1213 = vld [vmem:[%s4] sm:$0x1]
  %v1215 = vperm.slane %v1213, 0
  %v1233 = vunpack.c.l.b16 %v1197
  %v1234 = vunpack.c.l.b16 %v1198
  %v1235 = vunpack.c.l.b16 %v1199
  %v1236 = vunpack.c.l.b16 %v1200
  %v1237 = vunpack.c.l.b16 %v1201
  %v1238 = vunpack.c.l.b16 %v1202
  %v1239 = vunpack.c.l.b16 %v1203
  %v1240 = vunpack.c.l.b16 %v1204
  %v1241 = vunpack.c.l.b16 %v1205
  %v1242 = vunpack.c.l.b16 %v1206
  %v1243 = vunpack.c.l.b16 %v1207
  %v1244 = vunpack.c.l.b16 %v1208
  %v1245 = vunpack.c.l.b16 %v1209
  %v1246 = vunpack.c.l.b16 %v1210
  %v1247 = vunpack.c.l.b16 %v1211
  %v1248 = vunpack.c.l.b16 %v1212
  %v1249 = vpack.c.b16 %v1234, %v1233
  %v1250 = vpack.c.b16 %v1236, %v1235
  %v1251 = vpack.c.b16 %v1238, %v1237
  %v1252 = vpack.c.b16 %v1240, %v1239
  %v1253 = vpack.c.b16 %v1242, %v1241
  %v1254 = vpack.c.b16 %v1244, %v1243
  %v1255 = vpack.c.b16 %v1246, %v1245
  %v1256 = vpack.c.b16 %v1248, %v1247
  %1265 = vmatpush.bf16.msra.mxu0 %v1256
  %1266 = vmatpush.bf16.msra.mxu0 %v1255
  %1267 = vmatpush.bf16.msra.mxu0 %v1254
  %1268 = vmatpush.bf16.msra.mxu0 %v1253
  %1269 = vmatpush.bf16.msra.mxu0 %v1252
  %1270 = vmatpush.bf16.msra.mxu0 %v1251
  %1271 = vmatpush.bf16.msra.mxu0 %v1250
  %1272 = vmatpush.bf16.msra.mxu0 %v1249
  %1273 = vmatmul.bf16.gmra.mxu0 %v1189
  %v1274 = vpop.f32.mrf.mxu0
  %v1275 = vadd.f32 %v1215, %v1274
  %v1276 = vpop.f32.mrf.mxu0
  %v1277 = vadd.f32 %v1215, %v1276
  %1278 = vmatmul.bf16.gmra.mxu0 %v1190
  %v1279 = vpop.f32.mrf.mxu0
  %v1280 = vadd.f32 %v1215, %v1279
  %v1281 = vpop.f32.mrf.mxu0
  %v1282 = vadd.f32 %v1215, %v1281
  %1283 = vmatmul.bf16.gmra.mxu0 %v1191
  %v1284 = vpop.f32.mrf.mxu0
  %v1285 = vadd.f32 %v1215, %v1284
  %v1286 = vpop.f32.mrf.mxu0
  %v1287 = vadd.f32 %v1215, %v1286
  %1288 = vmatmul.bf16.gmra.mxu0 %v1192
  %v1289 = vpop.f32.mrf.mxu0
  %v1290 = vadd.f32 %v1215, %v1289
  %v1291 = vpop.f32.mrf.mxu0
  %v1292 = vadd.f32 %v1215, %v1291
  %1293 = vmatmul.bf16.gmra.mxu0 %v1193
  %v1294 = vpop.f32.mrf.mxu0
  %v1295 = vadd.f32 %v1215, %v1294
  %v1296 = vpop.f32.mrf.mxu0
  %v1297 = vadd.f32 %v1215, %v1296
  %1298 = vmatmul.bf16.gmra.mxu0 %v1194
  %v1299 = vpop.f32.mrf.mxu0
  %v1300 = vadd.f32 %v1215, %v1299
  %v1301 = vpop.f32.mrf.mxu0
  %v1302 = vadd.f32 %v1215, %v1301
  %1303 = vmatmul.bf16.gmra.mxu0 %v1195
  %v1304 = vpop.f32.mrf.mxu0
  %v1305 = vadd.f32 %v1215, %v1304
  %v1306 = vpop.f32.mrf.mxu0
  %v1307 = vadd.f32 %v1215, %v1306
  %1308 = vmatmul.bf16.gmra.mxu0 %v1196
  %v1309 = vpop.f32.mrf.mxu0
  %v1310 = vadd.f32 %v1215, %v1309
  %v1311 = vpop.f32.mrf.mxu0
  %v1312 = vadd.f32 %v1215, %v1311
  %1313 = vdwg.mxu0
  %v1314 = vmax.f32 %v1275, 0.0
  %v1315 = vmax.f32 %v1277, 0.0
  %v1316 = vmax.f32 %v1280, 0.0
  %v1317 = vmax.f32 %v1282, 0.0
  %v1318 = vmax.f32 %v1285, 0.0
  %v1319 = vmax.f32 %v1287, 0.0
  %v1320 = vmax.f32 %v1290, 0.0
  %v1321 = vmax.f32 %v1292, 0.0
  %v1322 = vmax.f32 %v1295, 0.0
  %v1323 = vmax.f32 %v1297, 0.0
  %v1324 = vmax.f32 %v1300, 0.0
  %v1325 = vmax.f32 %v1302, 0.0
  %v1326 = vmax.f32 %v1305, 0.0
  %v1327 = vmax.f32 %v1307, 0.0
  %v1328 = vmax.f32 %v1310, 0.0
  %v1329 = vmax.f32 %v1312, 0.0
  %v1330 = vpack.c.bf16 %v1315, %v1314
  %v1331 = vpack.c.bf16 %v1317, %v1316
  %v1332 = vpack.c.bf16 %v1319, %v1318
  %v1333 = vpack.c.bf16 %v1321, %v1320
  %v1334 = vpack.c.bf16 %v1323, %v1322
  %v1335 = vpack.c.bf16 %v1325, %v1324
  %v1336 = vpack.c.bf16 %v1327, %v1326
  %v1337 = vpack.c.bf16 %v1329, %v1328
  %v1338 = vld [vmem:[%s5] sm:$0xf]
  %v1339 = vld [vmem:[%s5 + $0x4] sm:$0xf]
  %v1340 = vld [vmem:[%s5 + $0x8] sm:$0xf]
  %v1341 = vld [vmem:[%s5 + $0xc] sm:$0xf]
  %v1342 = vld [vmem:[%s5 + $0x10] sm:$0xf]
  %v1343 = vld [vmem:[%s5 + $0x14] sm:$0xf]
  %v1344 = vld [vmem:[%s5 + $0x18] sm:$0xf]
  %v1345 = vld [vmem:[%s5 + $0x1c] sm:$0xf]
  %v1346 = vld [vmem:[%s5 + $0x20] sm:$0xf]
  %v1347 = vld [vmem:[%s5 + $0x24] sm:$0xf]
  %v1348 = vld [vmem:[%s5 + $0x28] sm:$0xf]
  %v1349 = vld [vmem:[%s5 + $0x2c] sm:$0xf]
  %v1350 = vld [vmem:[%s5 + $0x30] sm:$0xf]
  %v1351 = vld [vmem:[%s5 + $0x34] sm:$0xf]
  %v1352 = vld [vmem:[%s5 + $0x38] sm:$0xf]
  %v1353 = vld [vmem:[%s5 + $0x3c] sm:$0xf]
  %v1354 = vld [vmem:[%s6] sm:$0x1]
  %v1356 = vperm.slane %v1354, 0
  %v1374 = vunpack.c.l.b16 %v1338
  %v1375 = vunpack.c.l.b16 %v1339
  %v1376 = vunpack.c.l.b16 %v1340
  %v1377 = vunpack.c.l.b16 %v1341
  %v1378 = vunpack.c.l.b16 %v1342
  %v1379 = vunpack.c.l.b16 %v1343
  %v1380 = vunpack.c.l.b16 %v1344
  %v1381 = vunpack.c.l.b16 %v1345
  %v1382 = vunpack.c.l.b16 %v1346
  %v1383 = vunpack.c.l.b16 %v1347
  %v1384 = vunpack.c.l.b16 %v1348
  %v1385 = vunpack.c.l.b16 %v1349
  %v1386 = vunpack.c.l.b16 %v1350
  %v1387 = vunpack.c.l.b16 %v1351
  %v1388 = vunpack.c.l.b16 %v1352
  %v1389 = vunpack.c.l.b16 %v1353
  %v1390 = vpack.c.b16 %v1375, %v1374
  %v1391 = vpack.c.b16 %v1377, %v1376
  %v1392 = vpack.c.b16 %v1379, %v1378
  %v1393 = vpack.c.b16 %v1381, %v1380
  %v1394 = vpack.c.b16 %v1383, %v1382
  %v1395 = vpack.c.b16 %v1385, %v1384
  %v1396 = vpack.c.b16 %v1387, %v1386
  %v1397 = vpack.c.b16 %v1389, %v1388
  %1406 = vmatpush.bf16.msra.mxu0 %v1397
  %1407 = vmatpush.bf16.msra.mxu0 %v1396
  %1408 = vmatpush.bf16.msra.mxu0 %v1395
  %1409 = vmatpush.bf16.msra.mxu0 %v1394
  %1410 = vmatpush.bf16.msra.mxu0 %v1393
  %1411 = vmatpush.bf16.msra.mxu0 %v1392
  %1412 = vmatpush.bf16.msra.mxu0 %v1391
  %1413 = vmatpush.bf16.msra.mxu0 %v1390
  %1414 = vmatmul.bf16.gmra.mxu0 %v1330
  %v1415 = vpop.f32.mrf.mxu0
  %v1416 = vadd.f32 %v1356, %v1415
  %v1417 = vpop.f32.mrf.mxu0
  %v1418 = vadd.f32 %v1356, %v1417
  %1419 = vmatmul.bf16.gmra.mxu0 %v1331
  %v1420 = vpop.f32.mrf.mxu0
  %v1421 = vadd.f32 %v1356, %v1420
  %v1422 = vpop.f32.mrf.mxu0
  %v1423 = vadd.f32 %v1356, %v1422
  %1424 = vmatmul.bf16.gmra.mxu0 %v1332
  %v1425 = vpop.f32.mrf.mxu0
  %v1426 = vadd.f32 %v1356, %v1425
  %v1427 = vpop.f32.mrf.mxu0
  %v1428 = vadd.f32 %v1356, %v1427
  %1429 = vmatmul.bf16.gmra.mxu0 %v1333
  %v1430 = vpop.f32.mrf.mxu0
  %v1431 = vadd.f32 %v1356, %v1430
  %v1432 = vpop.f32.mrf.mxu0
  %v1433 = vadd.f32 %v1356, %v1432
  %1434 = vmatmul.bf16.gmra.mxu0 %v1334
  %v1435 = vpop.f32.mrf.mxu0
  %v1436 = vadd.f32 %v1356, %v1435
  %v1437 = vpop.f32.mrf.mxu0
  %v1438 = vadd.f32 %v1356, %v1437
  %1439 = vmatmul.bf16.gmra.mxu0 %v1335
  %v1440 = vpop.f32.mrf.mxu0
  %v1441 = vadd.f32 %v1356, %v1440
  %v1442 = vpop.f32.mrf.mxu0
  %v1443 = vadd.f32 %v1356, %v1442
  %1444 = vmatmul.bf16.gmra.mxu0 %v1336
  %v1445 = vpop.f32.mrf.mxu0
  %v1446 = vadd.f32 %v1356, %v1445
  %v1447 = vpop.f32.mrf.mxu0
  %v1448 = vadd.f32 %v1356, %v1447
  %1449 = vmatmul.bf16.gmra.mxu0 %v1337
  %v1450 = vpop.f32.mrf.mxu0
  %v1451 = vadd.f32 %v1356, %v1450
  %v1452 = vpop.f32.mrf.mxu0
  %v1453 = vadd.f32 %v1356, %v1452
  %1454 = vdwg.mxu0
  %1455 = vmax.xlane.f32.xlu0 %v1416
  %v1456 = vpop.xlane.xlu0 %1455
  %1457 = vmax.xlane.f32.xlu0 %v1418
  %v1458 = vpop.xlane.xlu0 %1457
  %1459 = vmax.xlane.f32.xlu0 %v1421
  %v1460 = vpop.xlane.xlu0 %1459
  %1461 = vmax.xlane.f32.xlu0 %v1423
  %v1462 = vpop.xlane.xlu0 %1461
  %1463 = vmax.xlane.f32.xlu0 %v1426
  %v1464 = vpop.xlane.xlu0 %1463
  %1465 = vmax.xlane.f32.xlu0 %v1428
  %v1466 = vpop.xlane.xlu0 %1465
  %1467 = vmax.xlane.f32.xlu0 %v1431
  %v1468 = vpop.xlane.xlu0 %1467
  %1469 = vmax.xlane.f32.xlu0 %v1433
  %v1470 = vpop.xlane.xlu0 %1469
  %1471 = vmax.xlane.f32.xlu0 %v1436
  %v1472 = vpop.xlane.xlu0 %1471
  %1473 = vmax.xlane.f32.xlu0 %v1438
  %v1474 = vpop.xlane.xlu0 %1473
  %1475 = vmax.xlane.f32.xlu0 %v1441
  %v1476 = vpop.xlane.xlu0 %1475
  %1477 = vmax.xlane.f32.xlu0 %v1443
  %v1478 = vpop.xlane.xlu0 %1477
  %1479 = vmax.xlane.f32.xlu0 %v1446
  %v1480 = vpop.xlane.xlu0 %1479
  %1481 = vmax.xlane.f32.xlu0 %v1448
  %v1482 = vpop.xlane.xlu0 %1481
  %1483 = vmax.xlane.f32.xlu0 %v1451
  %v1484 = vpop.xlane.xlu0 %1483
  %1485 = vmax.xlane.f32.xlu0 %v1453
  %v1486 = vpop.xlane.xlu0 %1485
  %v1487 = vsub.f32 %v1416, %v1456
  %v1488 = vsub.f32 %v1418, %v1458
  %v1489 = vsub.f32 %v1421, %v1460
  %v1490 = vsub.f32 %v1423, %v1462
  %v1491 = vsub.f32 %v1426, %v1464
  %v1492 = vsub.f32 %v1428, %v1466
  %v1493 = vsub.f32 %v1431, %v1468
  %v1494 = vsub.f32 %v1433, %v1470
  %v1495 = vsub.f32 %v1436, %v1472
  %v1496 = vsub.f32 %v1438, %v1474
  %v1497 = vsub.f32 %v1441, %v1476
  %v1498 = vsub.f32 %v1443, %v1478
  %v1499 = vsub.f32 %v1446, %v1480
  %v1500 = vsub.f32 %v1448, %v1482
  %v1501 = vsub.f32 %v1451, %v1484
  %v1502 = vsub.f32 %v1453, %v1486
  %v1503 = vmul.f32 %v1487, 1.442695
  %v1504 = vpow.pop %v1503
  %v1505 = vmul.f32 %v1488, 1.442695
  %v1506 = vpow.pop %v1505
  %v1507 = vmul.f32 %v1489, 1.442695
  %v1508 = vpow.pop %v1507
  %v1509 = vmul.f32 %v1490, 1.442695
  %v1510 = vpow.pop %v1509
  %v1511 = vmul.f32 %v1491, 1.442695
  %v1512 = vpow.pop %v1511
  %v1513 = vmul.f32 %v1492, 1.442695
  %v1514 = vpow.pop %v1513
  %v1515 = vmul.f32 %v1493, 1.442695
  %v1516 = vpow.pop %v1515
  %v1517 = vmul.f32 %v1494, 1.442695
  %v1518 = vpow.pop %v1517
  %v1519 = vmul.f32 %v1495, 1.442695
  %v1520 = vpow.pop %v1519
  %v1521 = vmul.f32 %v1496, 1.442695
  %v1522 = vpow.pop %v1521
  %v1523 = vmul.f32 %v1497, 1.442695
  %v1524 = vpow.pop %v1523
  %v1525 = vmul.f32 %v1498, 1.442695
  %v1526 = vpow.pop %v1525
  %v1527 = vmul.f32 %v1499, 1.442695
  %v1528 = vpow.pop %v1527
  %v1529 = vmul.f32 %v1500, 1.442695
  %v1530 = vpow.pop %v1529
  %v1531 = vmul.f32 %v1501, 1.442695
  %v1532 = vpow.pop %v1531
  %v1533 = vmul.f32 %v1502, 1.442695
  %v1534 = vpow.pop %v1533
  %1535 = vadd.xlane.f32.xlu0 %v1504
  %v1536 = vpop.xlane.xlu0 %1535
  %1537 = vadd.xlane.f32.xlu0 %v1506
  %v1538 = vpop.xlane.xlu0 %1537
  %1539 = vadd.xlane.f32.xlu0 %v1508
  %v1540 = vpop.xlane.xlu0 %1539
  %1541 = vadd.xlane.f32.xlu0 %v1510
  %v1542 = vpop.xlane.xlu0 %1541
  %1543 = vadd.xlane.f32.xlu0 %v1512
  %v1544 = vpop.xlane.xlu0 %1543
  %1545 = vadd.xlane.f32.xlu0 %v1514
  %v1546 = vpop.xlane.xlu0 %1545
  %1547 = vadd.xlane.f32.xlu0 %v1516
  %v1548 = vpop.xlane.xlu0 %1547
  %1549 = vadd.xlane.f32.xlu0 %v1518
  %v1550 = vpop.xlane.xlu0 %1549
  %1551 = vadd.xlane.f32.xlu0 %v1520
  %v1552 = vpop.xlane.xlu0 %1551
  %1553 = vadd.xlane.f32.xlu0 %v1522
  %v1554 = vpop.xlane.xlu0 %1553
  %1555 = vadd.xlane.f32.xlu0 %v1524
  %v1556 = vpop.xlane.xlu0 %1555
  %1557 = vadd.xlane.f32.xlu0 %v1526
  %v1558 = vpop.xlane.xlu0 %1557
  %1559 = vadd.xlane.f32.xlu0 %v1528
  %v1560 = vpop.xlane.xlu0 %1559
  %1561 = vadd.xlane.f32.xlu0 %v1530
  %v1562 = vpop.xlane.xlu0 %1561
  %1563 = vadd.xlane.f32.xlu0 %v1532
  %v1564 = vpop.xlane.xlu0 %1563
  %1565 = vadd.xlane.f32.xlu0 %v1534
  %v1566 = vpop.xlane.xlu0 %1565
  %v1567 = vrcp.pop %v1536
  %v1568 = vmul.f32 %v1536, %v1567
  %v1569 = vsub.f32 1.0, %v1568
  %v1570 = vmul.f32 %v1567, %v1569
  %v1571 = vadd.f32 %v1567, %v1570
  %vm1572 = vweird.f32 %v1536
  %vm1573 = vweird.f32 %v1567
  %vm1574 = vmor %vm1572, %vm1573
  %v1575 = vsel %vm1574, %v1567, %v1571
  %v1576 = vand.u32 2147483647, %v1536
  %vm1577 = vcmp.eq.f32.partialorder %v1576, 8.507059e+37
  %v1578 = vand.u32 %v1536, 2147483648
  %v1579 = vor.u32 1.1754944e-38, %v1578
  %v1580 = vsel %vm1577, %v1579, %v1575
  %v1581 = vrcp.pop %v1538
  %v1582 = vmul.f32 %v1538, %v1581
  %v1583 = vsub.f32 1.0, %v1582
  %v1584 = vmul.f32 %v1581, %v1583
  %v1585 = vadd.f32 %v1581, %v1584
  %vm1586 = vweird.f32 %v1538
  %vm1587 = vweird.f32 %v1581
  %vm1588 = vmor %vm1586, %vm1587
  %v1589 = vsel %vm1588, %v1581, %v1585
  %v1590 = vand.u32 2147483647, %v1538
  %vm1591 = vcmp.eq.f32.partialorder %v1590, 8.507059e+37
  %v1592 = vand.u32 %v1538, 2147483648
  %v1593 = vor.u32 1.1754944e-38, %v1592
  %v1594 = vsel %vm1591, %v1593, %v1589
  %v1595 = vrcp.pop %v1540
  %v1596 = vmul.f32 %v1540, %v1595
  %v1597 = vsub.f32 1.0, %v1596
  %v1598 = vmul.f32 %v1595, %v1597
  %v1599 = vadd.f32 %v1595, %v1598
  %vm1600 = vweird.f32 %v1540
  %vm1601 = vweird.f32 %v1595
  %vm1602 = vmor %vm1600, %vm1601
  %v1603 = vsel %vm1602, %v1595, %v1599
  %v1604 = vand.u32 2147483647, %v1540
  %vm1605 = vcmp.eq.f32.partialorder %v1604, 8.507059e+37
  %v1606 = vand.u32 %v1540, 2147483648
  %v1607 = vor.u32 1.1754944e-38, %v1606
  %v1608 = vsel %vm1605, %v1607, %v1603
  %v1609 = vrcp.pop %v1542
  %v1610 = vmul.f32 %v1542, %v1609
  %v1611 = vsub.f32 1.0, %v1610
  %v1612 = vmul.f32 %v1609, %v1611
  %v1613 = vadd.f32 %v1609, %v1612
  %vm1614 = vweird.f32 %v1542
  %vm1615 = vweird.f32 %v1609
  %vm1616 = vmor %vm1614, %vm1615
  %v1617 = vsel %vm1616, %v1609, %v1613
  %v1618 = vand.u32 2147483647, %v1542
  %vm1619 = vcmp.eq.f32.partialorder %v1618, 8.507059e+37
  %v1620 = vand.u32 %v1542, 2147483648
  %v1621 = vor.u32 1.1754944e-38, %v1620
  %v1622 = vsel %vm1619, %v1621, %v1617
  %v1623 = vrcp.pop %v1544
  %v1624 = vmul.f32 %v1544, %v1623
  %v1625 = vsub.f32 1.0, %v1624
  %v1626 = vmul.f32 %v1623, %v1625
  %v1627 = vadd.f32 %v1623, %v1626
  %vm1628 = vweird.f32 %v1544
  %vm1629 = vweird.f32 %v1623
  %vm1630 = vmor %vm1628, %vm1629
  %v1631 = vsel %vm1630, %v1623, %v1627
  %v1632 = vand.u32 2147483647, %v1544
  %vm1633 = vcmp.eq.f32.partialorder %v1632, 8.507059e+37
  %v1634 = vand.u32 %v1544, 2147483648
  %v1635 = vor.u32 1.1754944e-38, %v1634
  %v1636 = vsel %vm1633, %v1635, %v1631
  %v1637 = vrcp.pop %v1546
  %v1638 = vmul.f32 %v1546, %v1637
  %v1639 = vsub.f32 1.0, %v1638
  %v1640 = vmul.f32 %v1637, %v1639
  %v1641 = vadd.f32 %v1637, %v1640
  %vm1642 = vweird.f32 %v1546
  %vm1643 = vweird.f32 %v1637
  %vm1644 = vmor %vm1642, %vm1643
  %v1645 = vsel %vm1644, %v1637, %v1641
  %v1646 = vand.u32 2147483647, %v1546
  %vm1647 = vcmp.eq.f32.partialorder %v1646, 8.507059e+37
  %v1648 = vand.u32 %v1546, 2147483648
  %v1649 = vor.u32 1.1754944e-38, %v1648
  %v1650 = vsel %vm1647, %v1649, %v1645
  %v1651 = vrcp.pop %v1548
  %v1652 = vmul.f32 %v1548, %v1651
  %v1653 = vsub.f32 1.0, %v1652
  %v1654 = vmul.f32 %v1651, %v1653
  %v1655 = vadd.f32 %v1651, %v1654
  %vm1656 = vweird.f32 %v1548
  %vm1657 = vweird.f32 %v1651
  %vm1658 = vmor %vm1656, %vm1657
  %v1659 = vsel %vm1658, %v1651, %v1655
  %v1660 = vand.u32 2147483647, %v1548
  %vm1661 = vcmp.eq.f32.partialorder %v1660, 8.507059e+37
  %v1662 = vand.u32 %v1548, 2147483648
  %v1663 = vor.u32 1.1754944e-38, %v1662
  %v1664 = vsel %vm1661, %v1663, %v1659
  %v1665 = vrcp.pop %v1550
  %v1666 = vmul.f32 %v1550, %v1665
  %v1667 = vsub.f32 1.0, %v1666
  %v1668 = vmul.f32 %v1665, %v1667
  %v1669 = vadd.f32 %v1665, %v1668
  %vm1670 = vweird.f32 %v1550
  %vm1671 = vweird.f32 %v1665
  %vm1672 = vmor %vm1670, %vm1671
  %v1673 = vsel %vm1672, %v1665, %v1669
  %v1674 = vand.u32 2147483647, %v1550
  %vm1675 = vcmp.eq.f32.partialorder %v1674, 8.507059e+37
  %v1676 = vand.u32 %v1550, 2147483648
  %v1677 = vor.u32 1.1754944e-38, %v1676
  %v1678 = vsel %vm1675, %v1677, %v1673
  %v1679 = vrcp.pop %v1552
  %v1680 = vmul.f32 %v1552, %v1679
  %v1681 = vsub.f32 1.0, %v1680
  %v1682 = vmul.f32 %v1679, %v1681
  %v1683 = vadd.f32 %v1679, %v1682
  %vm1684 = vweird.f32 %v1552
  %vm1685 = vweird.f32 %v1679
  %vm1686 = vmor %vm1684, %vm1685
  %v1687 = vsel %vm1686, %v1679, %v1683
  %v1688 = vand.u32 2147483647, %v1552
  %vm1689 = vcmp.eq.f32.partialorder %v1688, 8.507059e+37
  %v1690 = vand.u32 %v1552, 2147483648
  %v1691 = vor.u32 1.1754944e-38, %v1690
  %v1692 = vsel %vm1689, %v1691, %v1687
  %v1693 = vrcp.pop %v1554
  %v1694 = vmul.f32 %v1554, %v1693
  %v1695 = vsub.f32 1.0, %v1694
  %v1696 = vmul.f32 %v1693, %v1695
  %v1697 = vadd.f32 %v1693, %v1696
  %vm1698 = vweird.f32 %v1554
  %vm1699 = vweird.f32 %v1693
  %vm1700 = vmor %vm1698, %vm1699
  %v1701 = vsel %vm1700, %v1693, %v1697
  %v1702 = vand.u32 2147483647, %v1554
  %vm1703 = vcmp.eq.f32.partialorder %v1702, 8.507059e+37
  %v1704 = vand.u32 %v1554, 2147483648
  %v1705 = vor.u32 1.1754944e-38, %v1704
  %v1706 = vsel %vm1703, %v1705, %v1701
  %v1707 = vrcp.pop %v1556
  %v1708 = vmul.f32 %v1556, %v1707
  %v1709 = vsub.f32 1.0, %v1708
  %v1710 = vmul.f32 %v1707, %v1709
  %v1711 = vadd.f32 %v1707, %v1710
  %vm1712 = vweird.f32 %v1556
  %vm1713 = vweird.f32 %v1707
  %vm1714 = vmor %vm1712, %vm1713
  %v1715 = vsel %vm1714, %v1707, %v1711
  %v1716 = vand.u32 2147483647, %v1556
  %vm1717 = vcmp.eq.f32.partialorder %v1716, 8.507059e+37
  %v1718 = vand.u32 %v1556, 2147483648
  %v1719 = vor.u32 1.1754944e-38, %v1718
  %v1720 = vsel %vm1717, %v1719, %v1715
  %v1721 = vrcp.pop %v1558
  %v1722 = vmul.f32 %v1558, %v1721
  %v1723 = vsub.f32 1.0, %v1722
  %v1724 = vmul.f32 %v1721, %v1723
  %v1725 = vadd.f32 %v1721, %v1724
  %vm1726 = vweird.f32 %v1558
  %vm1727 = vweird.f32 %v1721
  %vm1728 = vmor %vm1726, %vm1727
  %v1729 = vsel %vm1728, %v1721, %v1725
  %v1730 = vand.u32 2147483647, %v1558
  %vm1731 = vcmp.eq.f32.partialorder %v1730, 8.507059e+37
  %v1732 = vand.u32 %v1558, 2147483648
  %v1733 = vor.u32 1.1754944e-38, %v1732
  %v1734 = vsel %vm1731, %v1733, %v1729
  %v1735 = vrcp.pop %v1560
  %v1736 = vmul.f32 %v1560, %v1735
  %v1737 = vsub.f32 1.0, %v1736
  %v1738 = vmul.f32 %v1735, %v1737
  %v1739 = vadd.f32 %v1735, %v1738
  %vm1740 = vweird.f32 %v1560
  %vm1741 = vweird.f32 %v1735
  %vm1742 = vmor %vm1740, %vm1741
  %v1743 = vsel %vm1742, %v1735, %v1739
  %v1744 = vand.u32 2147483647, %v1560
  %vm1745 = vcmp.eq.f32.partialorder %v1744, 8.507059e+37
  %v1746 = vand.u32 %v1560, 2147483648
  %v1747 = vor.u32 1.1754944e-38, %v1746
  %v1748 = vsel %vm1745, %v1747, %v1743
  %v1749 = vrcp.pop %v1562
  %v1750 = vmul.f32 %v1562, %v1749
  %v1751 = vsub.f32 1.0, %v1750
  %v1752 = vmul.f32 %v1749, %v1751
  %v1753 = vadd.f32 %v1749, %v1752
  %vm1754 = vweird.f32 %v1562
  %vm1755 = vweird.f32 %v1749
  %vm1756 = vmor %vm1754, %vm1755
  %v1757 = vsel %vm1756, %v1749, %v1753
  %v1758 = vand.u32 2147483647, %v1562
  %vm1759 = vcmp.eq.f32.partialorder %v1758, 8.507059e+37
  %v1760 = vand.u32 %v1562, 2147483648
  %v1761 = vor.u32 1.1754944e-38, %v1760
  %v1762 = vsel %vm1759, %v1761, %v1757
  %v1763 = vrcp.pop %v1564
  %v1764 = vmul.f32 %v1564, %v1763
  %v1765 = vsub.f32 1.0, %v1764
  %v1766 = vmul.f32 %v1763, %v1765
  %v1767 = vadd.f32 %v1763, %v1766
  %vm1768 = vweird.f32 %v1564
  %vm1769 = vweird.f32 %v1763
  %vm1770 = vmor %vm1768, %vm1769
  %v1771 = vsel %vm1770, %v1763, %v1767
  %v1772 = vand.u32 2147483647, %v1564
  %vm1773 = vcmp.eq.f32.partialorder %v1772, 8.507059e+37
  %v1774 = vand.u32 %v1564, 2147483648
  %v1775 = vor.u32 1.1754944e-38, %v1774
  %v1776 = vsel %vm1773, %v1775, %v1771
  %v1777 = vrcp.pop %v1566
  %v1778 = vmul.f32 %v1566, %v1777
  %v1779 = vsub.f32 1.0, %v1778
  %v1780 = vmul.f32 %v1777, %v1779
  %v1781 = vadd.f32 %v1777, %v1780
  %vm1782 = vweird.f32 %v1566
  %vm1783 = vweird.f32 %v1777
  %vm1784 = vmor %vm1782, %vm1783
  %v1785 = vsel %vm1784, %v1777, %v1781
  %v1786 = vand.u32 2147483647, %v1566
  %vm1787 = vcmp.eq.f32.partialorder %v1786, 8.507059e+37
  %v1788 = vand.u32 %v1566, 2147483648
  %v1789 = vor.u32 1.1754944e-38, %v1788
  %v1790 = vsel %vm1787, %v1789, %v1785
  %v1791 = vmul.f32 %v1504, %v1580
  %v1792 = vmul.f32 %v1506, %v1594
  %v1793 = vmul.f32 %v1508, %v1608
  %v1794 = vmul.f32 %v1510, %v1622
  %v1795 = vmul.f32 %v1512, %v1636
  %v1796 = vmul.f32 %v1514, %v1650
  %v1797 = vmul.f32 %v1516, %v1664
  %v1798 = vmul.f32 %v1518, %v1678
  %v1799 = vmul.f32 %v1520, %v1692
  %v1800 = vmul.f32 %v1522, %v1706
  %v1801 = vmul.f32 %v1524, %v1720
  %v1802 = vmul.f32 %v1526, %v1734
  %v1803 = vmul.f32 %v1528, %v1748
  %v1804 = vmul.f32 %v1530, %v1762
  %v1805 = vmul.f32 %v1532, %v1776
  %v1806 = vmul.f32 %v1534, %v1790
  %1807 = vst [vmem:[%s7] sm:$0xff] %v1791
  %1808 = vst [vmem:[%s7 + $0x8] sm:$0xff] %v1792
  %1809 = vst [vmem:[%s7 + $0x10] sm:$0xff] %v1793
  %1810 = vst [vmem:[%s7 + $0x18] sm:$0xff] %v1794
  %1811 = vst [vmem:[%s7 + $0x20] sm:$0xff] %v1795
  %1812 = vst [vmem:[%s7 + $0x28] sm:$0xff] %v1796
  %1813 = vst [vmem:[%s7 + $0x30] sm:$0xff] %v1797
  %1814 = vst [vmem:[%s7 + $0x38] sm:$0xff] %v1798
  %1815 = vst [vmem:[%s7 + $0x40] sm:$0xff] %v1799
  %1816 = vst [vmem:[%s7 + $0x48] sm:$0xff] %v1800
  %1817 = vst [vmem:[%s7 + $0x50] sm:$0xff] %v1801
  %1818 = vst [vmem:[%s7 + $0x58] sm:$0xff] %v1802
  %1819 = vst [vmem:[%s7 + $0x60] sm:$0xff] %v1803
  %1820 = vst [vmem:[%s7 + $0x68] sm:$0xff] %v1804
  %1821 = vst [vmem:[%s7 + $0x70] sm:$0xff] %v1805
  %1822 = vst [vmem:[%s7 + $0x78] sm:$0xff] %v1806
  // Predicated region
  $region30: #{mnist_forward_pallas.1} parent=0 // pred_check
    _
  $region31: #{mnist_forward_pallas.1} parent=0 // pred_check_branch
    %1824 = sbr.rel (0) target = $region33
  $region32: #{mnist_forward_pallas.1} parent=0 // pred_region
    _
  $region33: #{mnist_forward_pallas.1} parent=0 // pred_fallthru
    _
  // Predicated region
  $region34: #{mnist_forward_pallas.1} parent=0 // pred_check
    _
  $region35: #{mnist_forward_pallas.1} parent=0 // pred_check_branch
    %1826 = sbr.rel (0) target = $region37
  $region36: #{mnist_forward_pallas.1} parent=0 // pred_region
    _
  $region37: #{mnist_forward_pallas.1} parent=0 // pred_fallthru
    _

</llo_original>
